<compile_context>
chip_gen: v5e
topology: v5e:2x2
jax: 0.10.0
libtpu: 0.0.40
codegen_flags: <defaults>
</compile_context>

<pallas_src>
import functools

import jax
import jax.numpy as jnp
from jax.experimental import pallas as pl
from jax.experimental.pallas import tpu as pltpu


# ---------------------------------------------------------------------------
# Fused per-layer Pallas kernel
# ---------------------------------------------------------------------------
def _fused_layer_kernel(src_idx_ref, dst_idx_ref, a_ref, x_ref, w_ref, b_ref,
                        o_ref, wh_ref, acc_ref, *, tile_m, apply_act):
    """Grid = (etype, dst_row_tile); etypes are sorted by dst node type."""
    del src_idx_ref  # consumed only by the x BlockSpec index_map
    e = pl.program_id(0)
    t = pl.program_id(1)
    n_e = pl.num_programs(0)

    d = dst_idx_ref[e]
    prev_d = dst_idx_ref[jnp.maximum(e - 1, 0)]
    next_d = dst_idx_ref[jnp.minimum(e + 1, n_e - 1)]
    is_first_of_group = jnp.logical_or(e == 0, d != prev_d)
    is_last_of_group = jnp.logical_or(e == n_e - 1, d != next_d)

    # Hoisted per-etype Linear: Wh = X_src @ W + b, computed once per etype
    # (tile axis is inner + "arbitrary", so t==0 always runs first).
    @pl.when(t == 0)
    def _wh():
        wh = jnp.dot(x_ref[0], w_ref[0], preferred_element_type=jnp.float32)
        wh = wh + b_ref[0]
        wh_ref[...] = wh.astype(wh_ref.dtype)

    # Mean aggregation over incoming edges for this row tile:
    # msg = A_norm[e][rows of tile t] @ Wh   (MXU, bf16 in / f32 out)
    msg = jnp.dot(a_ref[0], wh_ref[...], preferred_element_type=jnp.float32)

    # Cross-etype 'sum' into the per-dst f32 VMEM accumulator.
    row = pl.multiple_of(t * tile_m, tile_m)

    @pl.when(is_first_of_group)
    def _set():
        acc_ref[pl.ds(row, tile_m), :] = msg

    @pl.when(jnp.logical_not(is_first_of_group))
    def _add():
        acc_ref[pl.ds(row, tile_m), :] = acc_ref[pl.ds(row, tile_m), :] + msg

    # Per-tile writeback at the last etype of this dst group
    # (+ fused leaky_relu and downcast for layer 1).
    @pl.when(is_last_of_group)
    def _out():
        h = acc_ref[pl.ds(row, tile_m), :]
        if apply_act:
            h = jnp.where(h >= 0, h, jnp.float32(0.01) * h)
        o_ref[0] = h.astype(o_ref.dtype)


def fused_hetero_layer(a_stack, feat_stack, w_stack, b_stack, src_idx, dst_idx,
                       *, tile_m, apply_act, out_dtype):
    """One HeteroRGCNLayer (+ optional leaky_relu) as a single pallas_call.

    a_stack   : (E, N_pad, N_pad)        bf16  row-normalized adjacency, dst-sorted
    feat_stack: (T, N_pad, F_in_pad)     bf16  stacked node features per ntype
    w_stack   : (E, F_in_pad, F_out_pad) bf16  per-etype Linear weight (in, out)
    b_stack   : (E, 1, F_out_pad)        f32   per-etype Linear bias
    src_idx/dst_idx : (E,) int32  node-type index per etype (dst-sorted order!)
    returns   : (T, N_pad, F_out_pad)    out_dtype
    """
    n_etypes, n_pad, _ = a_stack.shape
    n_ntypes, _, f_in_pad = feat_stack.shape
    f_out_pad = w_stack.shape[2]
    assert n_pad % tile_m == 0 and tile_m % 8 == 0
    n_tiles = n_pad // tile_m

    grid_spec = pltpu.PrefetchScalarGridSpec(
        num_scalar_prefetch=2,
        grid=(n_etypes, n_tiles),          # etype outer, dst-row-tile inner
        in_specs=[
            # A row tile for this etype (streamed; VMEM linear in N_pad).
            pl.BlockSpec((1, tile_m, n_pad), lambda e, t, src, dst: (e, t, 0)),
            # Source features picked per-etype via the prefetched src index;
            # block index is constant over the inner tile axis -> fetched once
            # per etype, not per tile.
            pl.BlockSpec((1, n_pad, f_in_pad),
                         lambda e, t, src, dst: (src[e], 0, 0)),
            pl.BlockSpec((1, f_in_pad, f_out_pad),
                         lambda e, t, src, dst: (e, 0, 0)),
            pl.BlockSpec((1, 1, f_out_pad), lambda e, t, src, dst: (e, 0, 0)),
        ],
        # Per-dst / per-tile output block (no T-sized resident slab).
        out_specs=pl.BlockSpec((1, tile_m, f_out_pad),
                               lambda e, t, src, dst: (dst[e], t, 0)),
        scratch_shapes=[
            pltpu.VMEM((n_pad, f_out_pad), jnp.bfloat16),   # hoisted Wh
            pltpu.VMEM((n_pad, f_out_pad), jnp.float32),    # per-dst accumulator
        ],
    )
    return pl.pallas_call(
        functools.partial(_fused_layer_kernel, tile_m=tile_m,
                          apply_act=apply_act),
        out_shape=jax.ShapeDtypeStruct((n_ntypes, n_pad, f_out_pad), out_dtype),
        grid_spec=grid_spec,
        compiler_params=pltpu.CompilerParams(
            # Both axes carry scratch state (Wh across tiles, acc across
            # etypes) -> sequential.  TODO(synk): v7x megacore split.
            dimension_semantics=("arbitrary", "arbitrary"),
            vmem_limit_bytes=48 * 1024 * 1024),
    )(src_idx, dst_idx, a_stack, feat_stack, w_stack, b_stack)


def hetero_rgcn_forward_pallas(a_stack, feat_stack, w1, b1, w2, b2,
                               src_idx, dst_idx, *, tile_m):
    # Layer 1 emits bf16 directly (f32 accumulate + leaky_relu + cast in-kernel),
    # so layer 2 consumes it with no intermediate f32 HBM round-trip.
    h1 = fused_hetero_layer(a_stack, feat_stack, w1, b1, src_idx, dst_idx,
                            tile_m=tile_m, apply_act=True,
                            out_dtype=jnp.bfloat16)
    h2 = fused_hetero_layer(a_stack, h1, w2, b2, src_idx, dst_idx,
                            tile_m=tile_m, apply_act=False,
                            out_dtype=jnp.float32)
    return h2


# ---------------------------------------------------------------------------
# Padding helpers + pure-JAX f32 reference
# ---------------------------------------------------------------------------
def _round_up(x, m):
    return ((x + m - 1) // m) * m


def _pad_to(x, shape):
    out = jnp.zeros(shape, x.dtype)
    return out.at[tuple(slice(0, s) for s in x.shape)].set(x)


def hetero_rgcn_reference(canonical_etypes, a_norms, embeddings, params1,
                          params2, num_nodes, hidden_size, out_size):
    def layer(feat, params, out_dim):
        h = {nt: jnp.zeros((n, out_dim), jnp.float32)
             for nt, n in num_nodes.items()}
        for (s, et, d) in canonical_etypes:
            w_t, b = params[et]
            wh = feat[s] @ w_t + b
            h[d] = h[d] + a_norms[et] @ wh
        return h

    h = layer(embeddings, params1, hidden_size)
    h = {k: jnp.where(v >= 0, v, 0.01 * v) for k, v in h.items()}
    h = layer(h, params2, out_size)
    return h['Paper']


# ---------------------------------------------------------------------------
# Main: synthetic heterograph + deterministic parameters
# ---------------------------------------------------------------------------
if __name__ == "__main__":
    key = jax.random.PRNGKey(0)

    num_nodes = {'Paper': 24, 'Author': 16, 'Subject': 8}
    ntypes = ('Paper', 'Author', 'Subject')
    canonical_etypes = [
        ('Author', 'writes', 'Paper'),
        ('Paper', 'written_by', 'Author'),
        ('Paper', 'has_subject', 'Subject'),
        ('Subject', 'subject_of', 'Paper'),
    ]
    in_size, hidden_size, out_size = 16, 32, 8

    keys = jax.random.split(key, 16)
    embeddings = {
        'Paper': jax.random.normal(keys[0], (num_nodes['Paper'], in_size), jnp.float32),
        'Author': jax.random.normal(keys[1], (num_nodes['Author'], in_size), jnp.float32),
        'Subject': jax.random.normal(keys[2], (num_nodes['Subject'], in_size), jnp.float32),
    }

    # Dense random adjacency per etype, row-normalized (DGL fn.mean; zero
    # in-degree rows -> zero message).
    a_norms = {}
    for i, (src, etype, dst) in enumerate(canonical_etypes):
        adj = (jax.random.uniform(keys[3 + i],
                                  (num_nodes[dst], num_nodes[src])) < 0.4
               ).astype(jnp.float32)
        deg = jnp.clip(adj.sum(axis=1, keepdims=True), 1.0, None)
        a_norms[etype] = adj / deg

    def make_params(kbase, in_dim, out_dim):
        p = {}
        for j, (_, etype, _) in enumerate(canonical_etypes):
            kw, kb = jax.random.split(jax.random.fold_in(kbase, j))
            w_t = jax.random.normal(kw, (in_dim, out_dim), jnp.float32) * 0.1
            b = jax.random.normal(kb, (out_dim,), jnp.float32) * 0.1
            p[etype] = (w_t, b)
        return p

    params1 = make_params(keys[10], in_size, hidden_size)
    params2 = make_params(keys[11], hidden_size, out_size)

    # ---- pad & stack for the fused Pallas kernels -------------------------
    # Etypes MUST be grouped (sorted) by destination node type so the per-dst
    # accumulator / output-writeback logic sees dst-consecutive grid steps.
    etypes_by_dst = sorted(canonical_etypes, key=lambda c: ntypes.index(c[2]))

    tile_m = 8                                         # toy; use 128-256 for real graphs
    n_pad = _round_up(max(num_nodes.values()), tile_m)  # sublane/tile-aligned nodes
    f_in_pad = _round_up(in_size, 128)                 # lane-dense features
    f_hid_pad = _round_up(hidden_size, 128)
    f_out_pad = _round_up(out_size, 128)

    feat_stack = jnp.stack(
        [_pad_to(embeddings[nt], (n_pad, f_in_pad)) for nt in ntypes]
    ).astype(jnp.bfloat16)
    # Padded rows/cols of A are exactly zero -> bias in padded Wh rows and
    # padded dst rows never leak into real outputs.
    a_stack = jnp.stack(
        [_pad_to(a_norms[et], (n_pad, n_pad)) for (_, et, _) in etypes_by_dst]
    ).astype(jnp.bfloat16)
    src_idx = jnp.array([ntypes.index(s) for (s, _, _) in etypes_by_dst], jnp.int32)
    dst_idx = jnp.array([ntypes.index(d) for (_, _, d) in etypes_by_dst], jnp.int32)

    def stack_params(params, f_ip, f_op):
        w = jnp.stack([_pad_to(params[et][0], (f_ip, f_op))
                       for (_, et, _) in etypes_by_dst]).astype(jnp.bfloat16)
        b = jnp.stack([_pad_to(params[et][1][None, :], (1, f_op))
                       for (_, et, _) in etypes_by_dst]).astype(jnp.float32)
        return w, b

    w1, b1 = stack_params(params1, f_in_pad, f_hid_pad)
    w2, b2 = stack_params(params2, f_hid_pad, f_out_pad)

    forward = jax.jit(functools.partial(hetero_rgcn_forward_pallas, tile_m=tile_m))
    h2 = jax.block_until_ready(
        forward(a_stack, feat_stack, w1, b1, w2, b2, src_idx, dst_idx))
    out = h2[ntypes.index('Paper'), :num_nodes['Paper'], :out_size]

    # f32 reference on the un-padded problem; loose tolerance because the
    # Pallas kernel runs its matmuls with bf16 operands (f32 accumulation) and
    # the inter-layer activations travel as bf16.
    ref = hetero_rgcn_reference(canonical_etypes, a_norms, embeddings,
                                params1, params2, num_nodes,
                                hidden_size, out_size)

    assert out.shape == (num_nodes['Paper'], out_size)
    assert jnp.all(jnp.isfinite(out))
    assert float(jnp.max(jnp.abs(out - ref))) < 1e-1
    print("KERNEL_OK")
</pallas_src>

<mosaic_0001>
module attributes {stable_mosaic.version = 11 : i64} {
  func.func @_fused_layer_kernel(%arg0: i32, %arg1: i32, %arg2: memref<4xi32, #tpu.memory_space<smem>>, %arg3: memref<4xi32, #tpu.memory_space<smem>>, %arg4: memref<1x8x24xbf16, #tpu.memory_space<vmem>>, %arg5: memref<1x24x128xbf16, #tpu.memory_space<vmem>>, %arg6: memref<1x128x128xbf16, #tpu.memory_space<vmem>>, %arg7: memref<1x1x128xf32, #tpu.memory_space<vmem>>, %arg8: memref<1x8x128xbf16, #tpu.memory_space<vmem>>, %arg9: memref<24x128xbf16, #tpu.memory_space<vmem>>, %arg10: memref<24x128xf32, #tpu.memory_space<vmem>>) attributes {dimension_semantics = [#tpu.dimension_semantics<arbitrary>, #tpu.dimension_semantics<arbitrary>], iteration_bounds = array<i64: 4, 3>, scalar_prefetch = 2 : i64, scratch_operands = 2 : i64, tpu.core_type = #tpu.core_type<tc>, window_params = [{transform_indices = @transform_0, window_bounds = array<i64: 1, 8, 24>}, {transform_indices = @transform_1, window_bounds = array<i64: 1, 24, 128>}, {transform_indices = @transform_2, window_bounds = array<i64: 1, 128, 128>}, {transform_indices = @transform_3, window_bounds = array<i64: 1, 1, 128>}, {transform_indices = @transform_4, window_bounds = array<i64: 1, 8, 128>}]} {
    %0 = arith.index_cast %arg0 : i32 to index
    %1 = memref.load %arg3[%0] : memref<4xi32, #tpu.memory_space<smem>>
    %c1_i32 = arith.constant 1 : i32
    %2 = arith.subi %arg0, %c1_i32 : i32
    %c0_i32 = arith.constant 0 : i32
    %3 = arith.maxsi %2, %c0_i32 : i32
    %4 = arith.index_cast %3 : i32 to index
    %5 = memref.load %arg3[%4] : memref<4xi32, #tpu.memory_space<smem>>
    %c1_i32_0 = arith.constant 1 : i32
    %6 = arith.addi %arg0, %c1_i32_0 : i32
    %c3_i32 = arith.constant 3 : i32
    %7 = arith.minsi %6, %c3_i32 : i32
    %8 = arith.index_cast %7 : i32 to index
    %9 = memref.load %arg3[%8] : memref<4xi32, #tpu.memory_space<smem>>
    %c0_i32_1 = arith.constant 0 : i32
    %10 = arith.cmpi eq, %arg0, %c0_i32_1 : i32
    %11 = arith.cmpi ne, %1, %5 : i32
    %12 = arith.ori %10, %11 : i1
    %c3_i32_2 = arith.constant 3 : i32
    %13 = arith.cmpi eq, %arg0, %c3_i32_2 : i32
    %14 = arith.cmpi ne, %1, %9 : i32
    %15 = arith.ori %13, %14 : i1
    %c0_i32_3 = arith.constant 0 : i32
    %16 = arith.cmpi eq, %arg1, %c0_i32_3 : i32
    %17 = arith.extui %16 : i1 to i32
    %c0_i32_4 = arith.constant 0 : i32
    %18 = arith.cmpi ne, %17, %c0_i32_4 : i32
    scf.if %18 {
      %c0_12 = arith.constant 0 : index
      %c0_13 = arith.constant 0 : index
      %c0_14 = arith.constant 0 : index
      %32 = vector.load %arg5[%c0_12, %c0_13, %c0_14] : memref<1x24x128xbf16, #tpu.memory_space<vmem>>, vector<1x24x128xbf16>
      %33 = vector.shape_cast %32 : vector<1x24x128xbf16> to vector<24x128xbf16>
      %c0_15 = arith.constant 0 : index
      %c0_16 = arith.constant 0 : index
      %c0_17 = arith.constant 0 : index
      %34 = vector.load %arg6[%c0_15, %c0_16, %c0_17] : memref<1x128x128xbf16, #tpu.memory_space<vmem>>, vector<1x128x128xbf16>
      %35 = vector.shape_cast %34 : vector<1x128x128xbf16> to vector<128x128xbf16>
      %cst_18 = arith.constant dense<0.000000e+00> : vector<24x128xf32>
      %36 = tpu.matmul %33, %35, %cst_18 {dimension_numbers = #tpu.dot_dimension_numbers<[1], [0], [0], [1], [0, 0, 1, 1], [], []>} : vector<24x128xbf16>, vector<128x128xbf16>, vector<24x128xf32> -> vector<24x128xf32>
      %c0_19 = arith.constant 0 : index
      %c0_20 = arith.constant 0 : index
      %c0_21 = arith.constant 0 : index
      %37 = vector.load %arg7[%c0_19, %c0_20, %c0_21] : memref<1x1x128xf32, #tpu.memory_space<vmem>>, vector<1x1x128xf32>
      %38 = vector.shape_cast %37 : vector<1x1x128xf32> to vector<1x128xf32>
      %39 = vector.broadcast %38 : vector<1x128xf32> to vector<24x128xf32>
      %40 = arith.addf %36, %39 : vector<24x128xf32>
      %41 = arith.truncf %40 : vector<24x128xf32> to vector<24x128xbf16>
      %c0_22 = arith.constant 0 : index
      %c0_23 = arith.constant 0 : index
      %42 = vector.load %arg9[%c0_22, %c0_23] : memref<24x128xbf16, #tpu.memory_space<vmem>>, vector<24x128xbf16>
      tpu.vector_store %arg9[%c0_22, %c0_23], %41 {strides = array<i32>} : memref<24x128xbf16, #tpu.memory_space<vmem>>, vector<24x128xbf16>,
    } else {
    }
    %c0 = arith.constant 0 : index
    %c0_5 = arith.constant 0 : index
    %c0_6 = arith.constant 0 : index
    %19 = vector.load %arg4[%c0, %c0_5, %c0_6] : memref<1x8x24xbf16, #tpu.memory_space<vmem>>, vector<1x8x24xbf16>
    %20 = vector.shape_cast %19 : vector<1x8x24xbf16> to vector<8x24xbf16>
    %c0_7 = arith.constant 0 : index
    %c0_8 = arith.constant 0 : index
    %21 = vector.load %arg9[%c0_7, %c0_8] : memref<24x128xbf16, #tpu.memory_space<vmem>>, vector<24x128xbf16>
    %cst = arith.constant dense<0.000000e+00> : vector<8x128xf32>
    %22 = tpu.matmul %20, %21, %cst {dimension_numbers = #tpu.dot_dimension_numbers<[1], [0], [0], [1], [0, 0, 1, 1], [], []>} : vector<8x24xbf16>, vector<24x128xbf16>, vector<8x128xf32> -> vector<8x128xf32>
    %c8_i32 = arith.constant 8 : i32
    %23 = arith.muli %arg1, %c8_i32 : i32
    %24 = tpu.assume_multiple %23, 8 : i32
    %25 = arith.extui %12 : i1 to i32
    %c0_i32_9 = arith.constant 0 : i32
    %26 = arith.cmpi ne, %25, %c0_i32_9 : i32
    scf.if %26 {
      %32 = arith.index_cast %24 : i32 to index
      %c0_12 = arith.constant 0 : index
      %33 = vector.load %arg10[%32, %c0_12] : memref<24x128xf32, #tpu.memory_space<vmem>>, vector<8x128xf32>
      tpu.vector_store %arg10[%32, %c0_12], %22 {strides = array<i32>} : memref<24x128xf32, #tpu.memory_space<vmem>>, vector<8x128xf32>,
    } else {
    }
    %true = arith.constant true
    %27 = arith.xori %12, %true : i1
    %28 = arith.extui %27 : i1 to i32
    %c0_i32_10 = arith.constant 0 : i32
    %29 = arith.cmpi ne, %28, %c0_i32_10 : i32
    scf.if %29 {
      %32 = arith.index_cast %24 : i32 to index
      %c0_12 = arith.constant 0 : index
      %33 = vector.load %arg10[%32, %c0_12] : memref<24x128xf32, #tpu.memory_space<vmem>>, vector<8x128xf32>
      %34 = arith.addf %33, %22 : vector<8x128xf32>
      %35 = arith.index_cast %24 : i32 to index
      %c0_13 = arith.constant 0 : index
      %36 = vector.load %arg10[%35, %c0_13] : memref<24x128xf32, #tpu.memory_space<vmem>>, vector<8x128xf32>
      tpu.vector_store %arg10[%35, %c0_13], %34 {strides = array<i32>} : memref<24x128xf32, #tpu.memory_space<vmem>>, vector<8x128xf32>,
    } else {
    }
    %30 = arith.extui %15 : i1 to i32
    %c0_i32_11 = arith.constant 0 : i32
    %31 = arith.cmpi ne, %30, %c0_i32_11 : i32
    scf.if %31 {
      %32 = arith.index_cast %24 : i32 to index
      %c0_12 = arith.constant 0 : index
      %33 = vector.load %arg10[%32, %c0_12] : memref<24x128xf32, #tpu.memory_space<vmem>>, vector<8x128xf32>
      %cst_13 = arith.constant 0.000000e+00 : f32
      %34 = vector.broadcast %cst_13 : f32 to vector<8x128xf32>
      %35 = arith.cmpf oge, %33, %34 : vector<8x128xf32>
      %cst_14 = arith.constant 0.00999999977 : f32
      %36 = vector.broadcast %cst_14 : f32 to vector<8x128xf32>
      %37 = arith.mulf %36, %33 : vector<8x128xf32>
      %38 = arith.select %35, %33, %37 : vector<8x128xi1>, vector<8x128xf32>
      %39 = arith.truncf %38 : vector<8x128xf32> to vector<8x128xbf16>
      %c0_15 = arith.constant 0 : index
      %c0_16 = arith.constant 0 : index
      %c0_17 = arith.constant 0 : index
      %40 = vector.load %arg8[%c0_15, %c0_16, %c0_17] : memref<1x8x128xbf16, #tpu.memory_space<vmem>>, vector<1x8x128xbf16>
      %41 = vector.shape_cast %40 : vector<1x8x128xbf16> to vector<8x128xbf16>
      %42 = vector.shape_cast %39 : vector<8x128xbf16> to vector<1x8x128xbf16>
      tpu.vector_store %arg8[%c0_15, %c0_16, %c0_17], %42 {strides = array<i32>} : memref<1x8x128xbf16, #tpu.memory_space<vmem>>, vector<1x8x128xbf16>,
    } else {
    }
    return
  }
  func.func @transform_0(%arg0: i32, %arg1: i32, %arg2: memref<4xi32, #tpu.memory_space<smem>>, %arg3: memref<4xi32, #tpu.memory_space<smem>>) -> (i32, i32, i32) {
    %c0_i32 = arith.constant 0 : i32
    %c0_i32_0 = arith.constant 0 : i32
    return %arg0, %arg1, %c0_i32 : i32, i32, i32
  }
  func.func @transform_1(%arg0: i32, %arg1: i32, %arg2: memref<4xi32, #tpu.memory_space<smem>>, %arg3: memref<4xi32, #tpu.memory_space<smem>>) -> (i32, i32, i32) {
    %0 = arith.index_cast %arg0 : i32 to index
    %1 = memref.load %arg2[%0] : memref<4xi32, #tpu.memory_space<smem>>
    %c0_i32 = arith.constant 0 : i32
    %c0_i32_0 = arith.constant 0 : i32
    %c0_i32_1 = arith.constant 0 : i32
    return %1, %c0_i32, %c0_i32_0 : i32, i32, i32
  }
  func.func @transform_2(%arg0: i32, %arg1: i32, %arg2: memref<4xi32, #tpu.memory_space<smem>>, %arg3: memref<4xi32, #tpu.memory_space<smem>>) -> (i32, i32, i32) {
    %c0_i32 = arith.constant 0 : i32
    %c0_i32_0 = arith.constant 0 : i32
    %c0_i32_1 = arith.constant 0 : i32
    return %arg0, %c0_i32, %c0_i32_0 : i32, i32, i32
  }
  func.func @transform_3(%arg0: i32, %arg1: i32, %arg2: memref<4xi32, #tpu.memory_space<smem>>, %arg3: memref<4xi32, #tpu.memory_space<smem>>) -> (i32, i32, i32) {
    %c0_i32 = arith.constant 0 : i32
    %c0_i32_0 = arith.constant 0 : i32
    %c0_i32_1 = arith.constant 0 : i32
    return %arg0, %c0_i32, %c0_i32_0 : i32, i32, i32
  }
  func.func @transform_4(%arg0: i32, %arg1: i32, %arg2: memref<4xi32, #tpu.memory_space<smem>>, %arg3: memref<4xi32, #tpu.memory_space<smem>>) -> (i32, i32, i32) {
    %0 = arith.index_cast %arg0 : i32 to index
    %1 = memref.load %arg3[%0] : memref<4xi32, #tpu.memory_space<smem>>
    %c0_i32 = arith.constant 0 : i32
    %c0_i32_0 = arith.constant 0 : i32
    return %1, %arg1, %c0_i32 : i32, i32, i32
  }
}

module attributes {stable_mosaic.version = 11 : i64} {
  func.func @_fused_layer_kernel(%arg0: i32, %arg1: i32, %arg2: memref<4xi32, #tpu.memory_space<smem>>, %arg3: memref<4xi32, #tpu.memory_space<smem>>, %arg4: memref<1x8x24xbf16, #tpu.memory_space<vmem>>, %arg5: memref<1x24x128xbf16, #tpu.memory_space<vmem>>, %arg6: memref<1x128x128xbf16, #tpu.memory_space<vmem>>, %arg7: memref<1x1x128xf32, #tpu.memory_space<vmem>>, %arg8: memref<1x8x128xf32, #tpu.memory_space<vmem>>, %arg9: memref<24x128xbf16, #tpu.memory_space<vmem>>, %arg10: memref<24x128xf32, #tpu.memory_space<vmem>>) attributes {dimension_semantics = [#tpu.dimension_semantics<arbitrary>, #tpu.dimension_semantics<arbitrary>], iteration_bounds = array<i64: 4, 3>, scalar_prefetch = 2 : i64, scratch_operands = 2 : i64, tpu.core_type = #tpu.core_type<tc>, window_params = [{transform_indices = @transform_0, window_bounds = array<i64: 1, 8, 24>}, {transform_indices = @transform_1, window_bounds = array<i64: 1, 24, 128>}, {transform_indices = @transform_2, window_bounds = array<i64: 1, 128, 128>}, {transform_indices = @transform_3, window_bounds = array<i64: 1, 1, 128>}, {transform_indices = @transform_4, window_bounds = array<i64: 1, 8, 128>}]} {
    %0 = arith.index_cast %arg0 : i32 to index
    %1 = memref.load %arg3[%0] : memref<4xi32, #tpu.memory_space<smem>>
    %c1_i32 = arith.constant 1 : i32
    %2 = arith.subi %arg0, %c1_i32 : i32
    %c0_i32 = arith.constant 0 : i32
    %3 = arith.maxsi %2, %c0_i32 : i32
    %4 = arith.index_cast %3 : i32 to index
    %5 = memref.load %arg3[%4] : memref<4xi32, #tpu.memory_space<smem>>
    %c1_i32_0 = arith.constant 1 : i32
    %6 = arith.addi %arg0, %c1_i32_0 : i32
    %c3_i32 = arith.constant 3 : i32
    %7 = arith.minsi %6, %c3_i32 : i32
    %8 = arith.index_cast %7 : i32 to index
    %9 = memref.load %arg3[%8] : memref<4xi32, #tpu.memory_space<smem>>
    %c0_i32_1 = arith.constant 0 : i32
    %10 = arith.cmpi eq, %arg0, %c0_i32_1 : i32
    %11 = arith.cmpi ne, %1, %5 : i32
    %12 = arith.ori %10, %11 : i1
    %c3_i32_2 = arith.constant 3 : i32
    %13 = arith.cmpi eq, %arg0, %c3_i32_2 : i32
    %14 = arith.cmpi ne, %1, %9 : i32
    %15 = arith.ori %13, %14 : i1
    %c0_i32_3 = arith.constant 0 : i32
    %16 = arith.cmpi eq, %arg1, %c0_i32_3 : i32
    %17 = arith.extui %16 : i1 to i32
    %c0_i32_4 = arith.constant 0 : i32
    %18 = arith.cmpi ne, %17, %c0_i32_4 : i32
    scf.if %18 {
      %c0_12 = arith.constant 0 : index
      %c0_13 = arith.constant 0 : index
      %c0_14 = arith.constant 0 : index
      %32 = vector.load %arg5[%c0_12, %c0_13, %c0_14] : memref<1x24x128xbf16, #tpu.memory_space<vmem>>, vector<1x24x128xbf16>
      %33 = vector.shape_cast %32 : vector<1x24x128xbf16> to vector<24x128xbf16>
      %c0_15 = arith.constant 0 : index
      %c0_16 = arith.constant 0 : index
      %c0_17 = arith.constant 0 : index
      %34 = vector.load %arg6[%c0_15, %c0_16, %c0_17] : memref<1x128x128xbf16, #tpu.memory_space<vmem>>, vector<1x128x128xbf16>
      %35 = vector.shape_cast %34 : vector<1x128x128xbf16> to vector<128x128xbf16>
      %cst_18 = arith.constant dense<0.000000e+00> : vector<24x128xf32>
      %36 = tpu.matmul %33, %35, %cst_18 {dimension_numbers = #tpu.dot_dimension_numbers<[1], [0], [0], [1], [0, 0, 1, 1], [], []>} : vector<24x128xbf16>, vector<128x128xbf16>, vector<24x128xf32> -> vector<24x128xf32>
      %c0_19 = arith.constant 0 : index
      %c0_20 = arith.constant 0 : index
      %c0_21 = arith.constant 0 : index
      %37 = vector.load %arg7[%c0_19, %c0_20, %c0_21] : memref<1x1x128xf32, #tpu.memory_space<vmem>>, vector<1x1x128xf32>
      %38 = vector.shape_cast %37 : vector<1x1x128xf32> to vector<1x128xf32>
      %39 = vector.broadcast %38 : vector<1x128xf32> to vector<24x128xf32>
      %40 = arith.addf %36, %39 : vector<24x128xf32>
      %41 = arith.truncf %40 : vector<24x128xf32> to vector<24x128xbf16>
      %c0_22 = arith.constant 0 : index
      %c0_23 = arith.constant 0 : index
      %42 = vector.load %arg9[%c0_22, %c0_23] : memref<24x128xbf16, #tpu.memory_space<vmem>>, vector<24x128xbf16>
      tpu.vector_store %arg9[%c0_22, %c0_23], %41 {strides = array<i32>} : memref<24x128xbf16, #tpu.memory_space<vmem>>, vector<24x128xbf16>,
    } else {
    }
    %c0 = arith.constant 0 : index
    %c0_5 = arith.constant 0 : index
    %c0_6 = arith.constant 0 : index
    %19 = vector.load %arg4[%c0, %c0_5, %c0_6] : memref<1x8x24xbf16, #tpu.memory_space<vmem>>, vector<1x8x24xbf16>
    %20 = vector.shape_cast %19 : vector<1x8x24xbf16> to vector<8x24xbf16>
    %c0_7 = arith.constant 0 : index
    %c0_8 = arith.constant 0 : index
    %21 = vector.load %arg9[%c0_7, %c0_8] : memref<24x128xbf16, #tpu.memory_space<vmem>>, vector<24x128xbf16>
    %cst = arith.constant dense<0.000000e+00> : vector<8x128xf32>
    %22 = tpu.matmul %20, %21, %cst {dimension_numbers = #tpu.dot_dimension_numbers<[1], [0], [0], [1], [0, 0, 1, 1], [], []>} : vector<8x24xbf16>, vector<24x128xbf16>, vector<8x128xf32> -> vector<8x128xf32>
    %c8_i32 = arith.constant 8 : i32
    %23 = arith.muli %arg1, %c8_i32 : i32
    %24 = tpu.assume_multiple %23, 8 : i32
    %25 = arith.extui %12 : i1 to i32
    %c0_i32_9 = arith.constant 0 : i32
    %26 = arith.cmpi ne, %25, %c0_i32_9 : i32
    scf.if %26 {
      %32 = arith.index_cast %24 : i32 to index
      %c0_12 = arith.constant 0 : index
      %33 = vector.load %arg10[%32, %c0_12] : memref<24x128xf32, #tpu.memory_space<vmem>>, vector<8x128xf32>
      tpu.vector_store %arg10[%32, %c0_12], %22 {strides = array<i32>} : memref<24x128xf32, #tpu.memory_space<vmem>>, vector<8x128xf32>,
    } else {
    }
    %true = arith.constant true
    %27 = arith.xori %12, %true : i1
    %28 = arith.extui %27 : i1 to i32
    %c0_i32_10 = arith.constant 0 : i32
    %29 = arith.cmpi ne, %28, %c0_i32_10 : i32
    scf.if %29 {
      %32 = arith.index_cast %24 : i32 to index
      %c0_12 = arith.constant 0 : index
      %33 = vector.load %arg10[%32, %c0_12] : memref<24x128xf32, #tpu.memory_space<vmem>>, vector<8x128xf32>
      %34 = arith.addf %33, %22 : vector<8x128xf32>
      %35 = arith.index_cast %24 : i32 to index
      %c0_13 = arith.constant 0 : index
      %36 = vector.load %arg10[%35, %c0_13] : memref<24x128xf32, #tpu.memory_space<vmem>>, vector<8x128xf32>
      tpu.vector_store %arg10[%35, %c0_13], %34 {strides = array<i32>} : memref<24x128xf32, #tpu.memory_space<vmem>>, vector<8x128xf32>,
    } else {
    }
    %30 = arith.extui %15 : i1 to i32
    %c0_i32_11 = arith.constant 0 : i32
    %31 = arith.cmpi ne, %30, %c0_i32_11 : i32
    scf.if %31 {
      %32 = arith.index_cast %24 : i32 to index
      %c0_12 = arith.constant 0 : index
      %33 = vector.load %arg10[%32, %c0_12] : memref<24x128xf32, #tpu.memory_space<vmem>>, vector<8x128xf32>
      %c0_13 = arith.constant 0 : index
      %c0_14 = arith.constant 0 : index
      %c0_15 = arith.constant 0 : index
      %34 = vector.load %arg8[%c0_13, %c0_14, %c0_15] : memref<1x8x128xf32, #tpu.memory_space<vmem>>, vector<1x8x128xf32>
      %35 = vector.shape_cast %34 : vector<1x8x128xf32> to vector<8x128xf32>
      %36 = vector.shape_cast %33 : vector<8x128xf32> to vector<1x8x128xf32>
      tpu.vector_store %arg8[%c0_13, %c0_14, %c0_15], %36 {strides = array<i32>} : memref<1x8x128xf32, #tpu.memory_space<vmem>>, vector<1x8x128xf32>,
    } else {
    }
    return
  }
  func.func @transform_0(%arg0: i32, %arg1: i32, %arg2: memref<4xi32, #tpu.memory_space<smem>>, %arg3: memref<4xi32, #tpu.memory_space<smem>>) -> (i32, i32, i32) {
    %c0_i32 = arith.constant 0 : i32
    %c0_i32_0 = arith.constant 0 : i32
    return %arg0, %arg1, %c0_i32 : i32, i32, i32
  }
  func.func @transform_1(%arg0: i32, %arg1: i32, %arg2: memref<4xi32, #tpu.memory_space<smem>>, %arg3: memref<4xi32, #tpu.memory_space<smem>>) -> (i32, i32, i32) {
    %0 = arith.index_cast %arg0 : i32 to index
    %1 = memref.load %arg2[%0] : memref<4xi32, #tpu.memory_space<smem>>
    %c0_i32 = arith.constant 0 : i32
    %c0_i32_0 = arith.constant 0 : i32
    %c0_i32_1 = arith.constant 0 : i32
    return %1, %c0_i32, %c0_i32_0 : i32, i32, i32
  }
  func.func @transform_2(%arg0: i32, %arg1: i32, %arg2: memref<4xi32, #tpu.memory_space<smem>>, %arg3: memref<4xi32, #tpu.memory_space<smem>>) -> (i32, i32, i32) {
    %c0_i32 = arith.constant 0 : i32
    %c0_i32_0 = arith.constant 0 : i32
    %c0_i32_1 = arith.constant 0 : i32
    return %arg0, %c0_i32, %c0_i32_0 : i32, i32, i32
  }
  func.func @transform_3(%arg0: i32, %arg1: i32, %arg2: memref<4xi32, #tpu.memory_space<smem>>, %arg3: memref<4xi32, #tpu.memory_space<smem>>) -> (i32, i32, i32) {
    %c0_i32 = arith.constant 0 : i32
    %c0_i32_0 = arith.constant 0 : i32
    %c0_i32_1 = arith.constant 0 : i32
    return %arg0, %c0_i32, %c0_i32_0 : i32, i32, i32
  }
  func.func @transform_4(%arg0: i32, %arg1: i32, %arg2: memref<4xi32, #tpu.memory_space<smem>>, %arg3: memref<4xi32, #tpu.memory_space<smem>>) -> (i32, i32, i32) {
    %0 = arith.index_cast %arg0 : i32 to index
    %1 = memref.load %arg3[%0] : memref<4xi32, #tpu.memory_space<smem>>
    %c0_i32 = arith.constant 0 : i32
    %c0_i32_0 = arith.constant 0 : i32
    return %1, %arg1, %c0_i32 : i32, i32, i32
  }
}

</mosaic_0001>

<llo_original>
// kernel: hetero_rgcn_forward_pallas.2
$region0: #{hetero_rgcn_forward_pallas.2}
  #allocation0 [shape = 'u32[]', space=smem, size = 0x4, offset = 0x4, fixed_abs, tag = 'smem constant byte address 0x4 - core index']
  #allocation1 [shape = 'u32[72,128]{1,0:T(1,128)}', space=vmem, size = 0x9000, scoped, tag = 'internal scratch']
  #allocation2 [shape = 'bf16[24,128]{1,0:T(8,128)(2,1)}', space=vmem, size = 0x1800, scoped, tag = 'scratch operand']
  #allocation3 [shape = 'f32[24,128]{1,0:T(8,128)}', space=vmem, size = 0x3000, scoped, tag = 'scratch operand']
  #allocation4 [shape = 's32[1]{0}', space=sflag, size = 0x4, scoped, tag = 'scoped memory for hetero_rgcn_forward_pallas.2']
  #allocation5 [shape = 'u8[512]{0}', space=smem, size = 0x200, scoped, tag = 'prefetched SMEM operand 0']
  #allocation6 [shape = 'u8[512]{0}', space=smem, size = 0x200, scoped, tag = 'prefetched SMEM operand 1']
  %s0 = inlined_call_operand.vmem [shape: s32[4], index: 0, kind: input, shape index: {}]
  %s1 = inlined_call_operand.vmem [shape: s32[4], index: 1, kind: input, shape index: {}]
  %s2 = inlined_call_operand.hbm [shape: bf16[4,24,24], index: 2, kind: input, shape index: {}]
  %s3 = inlined_call_operand.hbm [shape: bf16[3,24,128], index: 3, kind: input, shape index: {}]
  %s4 = inlined_call_operand.hbm [shape: bf16[4,128,128], index: 4, kind: input, shape index: {}]
  %s5 = inlined_call_operand.hbm [shape: f32[4,1,128], index: 5, kind: input, shape index: {}]
  %s6 = inlined_call_operand.vmem [shape: bf16[3,24,128], index: 6, kind: output, shape index: {}]
  %s7 = sld [smem:[#allocation0]]
  $region81: #{hetero_rgcn_forward_pallas.2} parent=0
    _
  %s9 = ssub.s32 1, %s7
  %s10 = scalar_select 0, %s9, %s7
  %s12 = sshll.u32 %s0, 4
  %s13 = int_to_ptr.vmem [resolvable:$true] %s12
  %15 = dma.vmem_to_smem %s13, 16, [#allocation5], [#allocation4]
  %s17 = sshll.u32 %s1, 4
  %s18 = int_to_ptr.vmem [resolvable:$true] %s17
  %20 = dma.vmem_to_smem %s18, 16, [#allocation6], [#allocation4]
  %22 = dma.done [#allocation4], 32
  %23 = sfence
  $region1: #{hetero_rgcn_forward_pallas.2} parent=0
    #allocation7 [shape = 'u8[4096]{0}', space=vmem, size = 0x1000, scoped, tag = 'input window, operand 2']
    #allocation8 [shape = 's32[2]{0}', space=sflag, size = 0x8, scoped, tag = 'scoped memory for hetero_rgcn_forward_pallas.2']
    #allocation9 [shape = 'u8[12288]{0}', space=vmem, size = 0x3000, scoped, tag = 'input window, operand 3']
    #allocation10 [shape = 's32[2]{0}', space=sflag, size = 0x8, scoped, tag = 'scoped memory for hetero_rgcn_forward_pallas.2']
    #allocation11 [shape = 'u8[65536]{0}', space=vmem, size = 0x10000, scoped, tag = 'input window, operand 4']
    #allocation12 [shape = 'u8[1024]{0}', space=vmem, size = 0x400, scoped, tag = 'input window, operand 5']
    #allocation13 [shape = 's32[2]{0}', space=sflag, size = 0x8, scoped, tag = 'scoped memory for hetero_rgcn_forward_pallas.2']
    %24 = vsyncpa [#allocation8], 0
    %s25 = scalar_lea.sflag [#allocation8], 1
    %26 = vsyncpa %s25, 0
    %27 = vsyncpa [#allocation10], 0
    %s28 = scalar_lea.sflag [#allocation10], 1
    %29 = vsyncpa %s28, 0
    %30 = vsyncpa [#allocation13], 0
    %s31 = scalar_lea.sflag [#allocation13], 1
    %32 = vsyncpa %s31, 0
    loop: start=0, step=1, limit=14
    $region2: #{hetero_rgcn_forward_pallas.2} parent=1 // loop_pre_header
      _
    $region3: #{hetero_rgcn_forward_pallas.2} parent=1 // loop_header
      %s34 = sphi 0, %s38
      %p35 = scmp.ge.s32.totalorder %s34, 14
      %s41 = sphi 0, %s53
      %s42 = sphi 0, %s49
      %s43 = sphi 0, %s41
      %s44 = sphi 0, %s42
      %s45 = sphi 0, %s43
      %s46 = sphi 0, %s44
      %s58 = sphi 0, %s60
      %s61 = sphi 0, %s58
      %s62 = sphi 0, %s61
      %s78 = sphi 0, %s62
      %s86 = sphi 0, %s88
      %s89 = sphi 0, %s86
      %s90 = sphi 0, %s89
      %s106 = sphi 0, %s90
      %s112 = sphi 0, %s114
      %s115 = sphi 0, %s112
      %s116 = sphi 0, %s115
      %s132 = sphi 0, %s116
      %s138 = sphi 0, %s140
      %s141 = sphi 0, %s138
      %s142 = sphi 0, %s141
      %s158 = sphi 0, %s142
      %s168 = sphi 0, %s170
      %s171 = sphi 0, %s168
      %s172 = sphi 0, %s171
      %s188 = sphi 0, %s172
    $region4: #{hetero_rgcn_forward_pallas.2} parent=1 // loop_header_branch
      %37 = sbr.rel (%p35) target = $region8
    $region5: #{hetero_rgcn_forward_pallas.2} parent=1 // loop_body
      %s39 = ssub.s32 %s34, 1
      %s40 = ssub.s32 %s34, 2
      %s47 = sadd.s32 1, %s42
      %p48 = scmp.ge.s32.totalorder %s47, 3
      %s49 = scalar_select %p48, 0, %s47
      %s50 = sadd.s32 1, %s41
      %s51 = scalar_select %p48, %s50, %s41
      %p52 = scmp.ge.s32.totalorder %s51, 4
      %s53 = scalar_select %p52, 0, %s51
      %s54 = ssub.s32 %s41, %s53
      %s55 = ssub.s32 %s42, %s49
      %s56 = sor.u32 %s54, %s55
      %p57 = scmp.eq.s32.totalorder %s56, 0
      %s59 = sadd.s32 %s58, 1
      %s60 = scalar_select %p57, %s58, %s59
      %p63 = pneg %p57
      %p64 = scmp.eq.s32.totalorder %s34, 11
      %p65 = por %p63, %p64
      %p66 = scmp.ne.s32.totalorder %s58, %s61
      %p67 = scmp.eq.s32.totalorder %s34, 0
      %p68 = por %p66, %p67
      %p69 = scmp.ne.s32.totalorder %s58, %s61
      %p70 = scmp.eq.s32.totalorder %s39, 11
      %p71 = por %p69, %p70
      %p72 = scmp.ne.s32.totalorder %s61, %s62
      %p73 = scmp.eq.s32.totalorder %s39, 0
      %p74 = por %p72, %p73
      %p75 = scmp.ne.s32.totalorder %s61, %s62
      %p76 = scmp.eq.s32.totalorder %s40, 11
      %p77 = por %p75, %p76
      %p79 = scmp.ne.s32.totalorder %s62, %s78
      %p80 = scmp.eq.s32.totalorder %s40, 0
      %p81 = por %p79, %p80
      %s82 = sld [smem:[#allocation5 + %s41]]
      %s83 = sld [smem:[#allocation5 + %s53]]
      %s84 = ssub.s32 %s82, %s83
      %p85 = scmp.eq.s32.totalorder %s84, 0
      %s87 = sadd.s32 %s86, 1
      %s88 = scalar_select %p85, %s86, %s87
      %p91 = pneg %p85
      %p92 = scmp.eq.s32.totalorder %s34, 11
      %p93 = por %p91, %p92
      %p94 = scmp.ne.s32.totalorder %s86, %s89
      %p95 = scmp.eq.s32.totalorder %s34, 0
      %p96 = por %p94, %p95
      %p97 = scmp.ne.s32.totalorder %s86, %s89
      %p98 = scmp.eq.s32.totalorder %s39, 11
      %p99 = por %p97, %p98
      %p100 = scmp.ne.s32.totalorder %s89, %s90
      %p101 = scmp.eq.s32.totalorder %s39, 0
      %p102 = por %p100, %p101
      %p103 = scmp.ne.s32.totalorder %s89, %s90
      %p104 = scmp.eq.s32.totalorder %s40, 11
      %p105 = por %p103, %p104
      %p107 = scmp.ne.s32.totalorder %s90, %s106
      %p108 = scmp.eq.s32.totalorder %s40, 0
      %p109 = por %p107, %p108
      %s110 = ssub.s32 %s41, %s53
      %p111 = scmp.eq.s32.totalorder %s110, 0
      %s113 = sadd.s32 %s112, 1
      %s114 = scalar_select %p111, %s112, %s113
      %p117 = pneg %p111
      %p118 = scmp.eq.s32.totalorder %s34, 11
      %p119 = por %p117, %p118
      %p120 = scmp.ne.s32.totalorder %s112, %s115
      %p121 = scmp.eq.s32.totalorder %s34, 0
      %p122 = por %p120, %p121
      %p123 = scmp.ne.s32.totalorder %s112, %s115
      %p124 = scmp.eq.s32.totalorder %s39, 11
      %p125 = por %p123, %p124
      %p126 = scmp.ne.s32.totalorder %s115, %s116
      %p127 = scmp.eq.s32.totalorder %s39, 0
      %p128 = por %p126, %p127
      %p129 = scmp.ne.s32.totalorder %s115, %s116
      %p130 = scmp.eq.s32.totalorder %s40, 11
      %p131 = por %p129, %p130
      %p133 = scmp.ne.s32.totalorder %s116, %s132
      %p134 = scmp.eq.s32.totalorder %s40, 0
      %p135 = por %p133, %p134
      %s136 = ssub.s32 %s41, %s53
      %p137 = scmp.eq.s32.totalorder %s136, 0
      %s139 = sadd.s32 %s138, 1
      %s140 = scalar_select %p137, %s138, %s139
      %p143 = pneg %p137
      %p144 = scmp.eq.s32.totalorder %s34, 11
      %p145 = por %p143, %p144
      %p146 = scmp.ne.s32.totalorder %s138, %s141
      %p147 = scmp.eq.s32.totalorder %s34, 0
      %p148 = por %p146, %p147
      %p149 = scmp.ne.s32.totalorder %s138, %s141
      %p150 = scmp.eq.s32.totalorder %s39, 11
      %p151 = por %p149, %p150
      %p152 = scmp.ne.s32.totalorder %s141, %s142
      %p153 = scmp.eq.s32.totalorder %s39, 0
      %p154 = por %p152, %p153
      %p155 = scmp.ne.s32.totalorder %s141, %s142
      %p156 = scmp.eq.s32.totalorder %s40, 11
      %p157 = por %p155, %p156
      %p159 = scmp.ne.s32.totalorder %s142, %s158
      %p160 = scmp.eq.s32.totalorder %s40, 0
      %p161 = por %p159, %p160
      %s162 = sld [smem:[#allocation6 + %s41]]
      %s163 = sld [smem:[#allocation6 + %s53]]
      %s164 = ssub.s32 %s162, %s163
      %s165 = ssub.s32 %s42, %s49
      %s166 = sor.u32 %s164, %s165
      %p167 = scmp.eq.s32.totalorder %s166, 0
      %s169 = sadd.s32 %s168, 1
      %s170 = scalar_select %p167, %s168, %s169
      %p173 = pneg %p167
      %p174 = scmp.eq.s32.totalorder %s34, 11
      %p175 = por %p173, %p174
      %p176 = scmp.ne.s32.totalorder %s168, %s171
      %p177 = scmp.eq.s32.totalorder %s34, 0
      %p178 = por %p176, %p177
      %p179 = scmp.ne.s32.totalorder %s168, %s171
      %p180 = scmp.eq.s32.totalorder %s39, 11
      %p181 = por %p179, %p180
      %p182 = scmp.ne.s32.totalorder %s171, %s172
      %p183 = scmp.eq.s32.totalorder %s39, 0
      %p184 = por %p182, %p183
      %p185 = scmp.ne.s32.totalorder %s171, %s172
      %p186 = scmp.eq.s32.totalorder %s40, 11
      %p187 = por %p185, %p186
      %p189 = scmp.ne.s32.totalorder %s172, %s188
      %p190 = scmp.eq.s32.totalorder %s40, 0
      %p191 = por %p189, %p190
      %p192 = scmp.le.s32.totalorder 1, %s34
      %p193 = scmp.lt.s32.totalorder %s34, 13
      %p194 = pnand %p192, %p193
      %p195 = pneg %p194
      // Predicated region
      $region9: #{hetero_rgcn_forward_pallas.2} parent=5 // pred_check
        _
      $region10: #{hetero_rgcn_forward_pallas.2} parent=5 // pred_check_branch
        %197 = sbr.rel (%p194) target = $region12
      $region11: #{hetero_rgcn_forward_pallas.2} parent=5 // pred_region
        %s198 = ssub.s32 %s34, 1
      $region12: #{hetero_rgcn_forward_pallas.2} parent=5 // pred_fallthru
        _
      %p199 = scmp.lt.s32.totalorder %s34, 12
      // Predicated region
      $region13: #{hetero_rgcn_forward_pallas.2} parent=5 // pred_check
        %p200 = pneg %p199
      $region14: #{hetero_rgcn_forward_pallas.2} parent=5 // pred_check_branch
        %202 = sbr.rel (%p200) target = $region16
      $region15: #{hetero_rgcn_forward_pallas.2} parent=5 // pred_region
        // Predicated region
        $region17: #{hetero_rgcn_forward_pallas.2} parent=15 // pred_check
          %p203 = pneg %p68
        $region18: #{hetero_rgcn_forward_pallas.2} parent=15 // pred_check_branch
          %205 = sbr.rel (%p203) target = $region20
        $region19: #{hetero_rgcn_forward_pallas.2} parent=15 // pred_region
          %s206 = sand.u32 %s58, 1
          %s207 = scalar_lea.sflag [#allocation8], %s206
          %s208 = sand.u32 %s58, 1
          %s209 = smul.addr %s208, 4
          %s210 = scalar_lea.vmem [#allocation7], %s209
          %212 = vsyncadd %s207, 0
          %s213 = smul.addr %s41, 3
          %s214 = sadd.s32 %s42, %s213
          %s215 = smul.addr %s214, 4
          %s216 = scalar_lea.hbm %s2, %s215
          %s218 = sshll.u32 %s216, 4
          %s219 = int_to_ptr.hbm [resolvable:$true] %s218
          %s220 = sshll.u32 %s210, 4
          %s221 = int_to_ptr.vmem [resolvable:$true] %s220
          %223 = dma.hbm_to_vmem [thread:$0]  %s219, 64, %s221, %s207
        $region20: #{hetero_rgcn_forward_pallas.2} parent=15 // pred_fallthru
          _
        // Predicated region
        $region21: #{hetero_rgcn_forward_pallas.2} parent=15 // pred_check
          %p224 = pneg %p96
        $region22: #{hetero_rgcn_forward_pallas.2} parent=15 // pred_check_branch
          %226 = sbr.rel (%p224) target = $region24
        $region23: #{hetero_rgcn_forward_pallas.2} parent=15 // pred_region
          %s227 = sand.u32 %s34, 1
          %s228 = scalar_lea.sflag [#allocation10], %s227
          %s229 = sand.u32 %s86, 1
          %s230 = smul.addr %s229, 12
          %s231 = scalar_lea.vmem [#allocation9], %s230
          %s232 = sld [smem:[#allocation5 + %s41]]
          %234 = vsyncadd %s228, 0
          %s235 = smul.addr %s232, 3
          %s236 = smul.addr %s235, 4
          %s237 = scalar_lea.hbm %s3, %s236
          %s238 = sshll.u32 %s237, 4
          %s239 = int_to_ptr.hbm [resolvable:$true] %s238
          %s240 = sshll.u32 %s231, 4
          %s241 = int_to_ptr.vmem [resolvable:$true] %s240
          %246 = dma.hbm_to_vmem [thread:$0]  %s239, 192, %s241, %s228, 64, 64, 4
        $region24: #{hetero_rgcn_forward_pallas.2} parent=15 // pred_fallthru
          _
        // Predicated region
        $region25: #{hetero_rgcn_forward_pallas.2} parent=15 // pred_check
          %p247 = pneg %p122
        $region26: #{hetero_rgcn_forward_pallas.2} parent=15 // pred_check_branch
          %249 = sbr.rel (%p247) target = $region28
        $region27: #{hetero_rgcn_forward_pallas.2} parent=15 // pred_region
          %s250 = sand.u32 %s34, 1
          %s251 = scalar_lea.sflag [#allocation10], %s250
          %s252 = sand.u32 %s112, 1
          %s253 = smul.addr %s252, 64
          %s254 = scalar_lea.vmem [#allocation11], %s253
          %256 = vsyncadd %s251, 0
          %s257 = smul.addr %s41, 16
          %s258 = smul.addr %s257, 4
          %s259 = scalar_lea.hbm %s4, %s258
          %s260 = sshll.u32 %s259, 4
          %s261 = int_to_ptr.hbm [resolvable:$true] %s260
          %s262 = sshll.u32 %s254, 4
          %s263 = int_to_ptr.vmem [resolvable:$true] %s262
          %268 = dma.hbm_to_vmem [thread:$0]  %s261, 1024, %s263, %s251, 64, 64, 4
        $region28: #{hetero_rgcn_forward_pallas.2} parent=15 // pred_fallthru
          _
        // Predicated region
        $region29: #{hetero_rgcn_forward_pallas.2} parent=15 // pred_check
          %p269 = pneg %p148
        $region30: #{hetero_rgcn_forward_pallas.2} parent=15 // pred_check_branch
          %271 = sbr.rel (%p269) target = $region32
        $region31: #{hetero_rgcn_forward_pallas.2} parent=15 // pred_region
          %s272 = sand.u32 %s138, 1
          %s273 = scalar_lea.sflag [#allocation13], %s272
          %s274 = sand.u32 %s138, 1
          %s275 = scalar_lea.vmem [#allocation12], %s274
          %277 = vsyncadd %s273, 0
          %s278 = scalar_lea.hbm %s5, %s41
          %s280 = sshll.u32 %s278, 4
          %s281 = int_to_ptr.hbm [resolvable:$true] %s280
          %s282 = sshll.u32 %s275, 4
          %s283 = int_to_ptr.vmem [resolvable:$true] %s282
          %285 = dma.hbm_to_vmem [thread:$0]  %s281, 16, %s283, %s273
        $region32: #{hetero_rgcn_forward_pallas.2} parent=15 // pred_fallthru
          _
      $region16: #{hetero_rgcn_forward_pallas.2} parent=5 // pred_fallthru
        _
      %p286 = scmp.le.s32.totalorder 1, %s34
      %p287 = scmp.lt.s32.totalorder %s34, 13
      %p288 = pnand %p286, %p287
      %p289 = pneg %p288
      // Predicated region
      $region33: #{hetero_rgcn_forward_pallas.2} parent=5 // pred_check
        _
      $region34: #{hetero_rgcn_forward_pallas.2} parent=5 // pred_check_branch
        %291 = sbr.rel (%p288) target = $region36
      $region35: #{hetero_rgcn_forward_pallas.2} parent=5 // pred_region
        %s292 = ssub.s32 %s34, 1
        %s293 = sand.u32 %s61, 1
        %s294 = scalar_lea.sflag [#allocation8], %s293
        %s295 = sand.u32 %s61, 1
        %s296 = smul.addr %s295, 4
        %s297 = scalar_lea.vmem [#allocation7], %s296
        // Predicated region
        $region37: #{hetero_rgcn_forward_pallas.2} parent=35 // pred_check
          %p298 = pneg %p74
        $region38: #{hetero_rgcn_forward_pallas.2} parent=35 // pred_check_branch
          %300 = sbr.rel (%p298) target = $region40
        $region39: #{hetero_rgcn_forward_pallas.2} parent=35 // pred_region
          %302 = dma.done %s294, 64
        $region40: #{hetero_rgcn_forward_pallas.2} parent=35 // pred_fallthru
          _
        %s303 = sand.u32 %s39, 1
        %s304 = scalar_lea.sflag [#allocation10], %s303
        %s305 = sand.u32 %s89, 1
        %s306 = smul.addr %s305, 12
        %s307 = scalar_lea.vmem [#allocation9], %s306
        // Predicated region
        $region41: #{hetero_rgcn_forward_pallas.2} parent=35 // pred_check
          %p308 = pneg %p102
        $region42: #{hetero_rgcn_forward_pallas.2} parent=35 // pred_check_branch
          %310 = sbr.rel (%p308) target = $region44
        $region43: #{hetero_rgcn_forward_pallas.2} parent=35 // pred_region
          %312 = dma.done %s304, 192
        $region44: #{hetero_rgcn_forward_pallas.2} parent=35 // pred_fallthru
          _
        %s313 = sand.u32 %s39, 1
        %s314 = scalar_lea.sflag [#allocation10], %s313
        %s315 = sand.u32 %s115, 1
        %s316 = smul.addr %s315, 64
        %s317 = scalar_lea.vmem [#allocation11], %s316
        // Predicated region
        $region45: #{hetero_rgcn_forward_pallas.2} parent=35 // pred_check
          %p318 = pneg %p128
        $region46: #{hetero_rgcn_forward_pallas.2} parent=35 // pred_check_branch
          %320 = sbr.rel (%p318) target = $region48
        $region47: #{hetero_rgcn_forward_pallas.2} parent=35 // pred_region
          %322 = dma.done %s314, 1024
        $region48: #{hetero_rgcn_forward_pallas.2} parent=35 // pred_fallthru
          _
        %s323 = sand.u32 %s141, 1
        %s324 = scalar_lea.sflag [#allocation13], %s323
        %s325 = sand.u32 %s141, 1
        %s326 = scalar_lea.vmem [#allocation12], %s325
        // Predicated region
        $region49: #{hetero_rgcn_forward_pallas.2} parent=35 // pred_check
          %p327 = pneg %p154
        $region50: #{hetero_rgcn_forward_pallas.2} parent=35 // pred_check_branch
          %329 = sbr.rel (%p327) target = $region52
        $region51: #{hetero_rgcn_forward_pallas.2} parent=35 // pred_region
          %331 = dma.done %s324, 16
        $region52: #{hetero_rgcn_forward_pallas.2} parent=35 // pred_fallthru
          _
        %s332 = sand.u32 %s61, 1
        %s333 = scalar_lea.sflag [#allocation8], %s332
        %s334 = sand.u32 %s61, 1
        %s335 = smul.addr %s334, 4
        %s336 = scalar_lea.vmem [#allocation7], %s335
        %p337 = pneg %p74
        %p338 = pneg %p71
        %s339 = sand.u32 %s39, 1
        %s340 = scalar_lea.sflag [#allocation10], %s339
        %s341 = sand.u32 %s89, 1
        %s342 = smul.addr %s341, 12
        %s343 = scalar_lea.vmem [#allocation9], %s342
        %p344 = pneg %p102
        %p345 = pneg %p99
        %s346 = sand.u32 %s39, 1
        %s347 = scalar_lea.sflag [#allocation10], %s346
        %s348 = sand.u32 %s115, 1
        %s349 = smul.addr %s348, 64
        %s350 = scalar_lea.vmem [#allocation11], %s349
        %p351 = pneg %p128
        %p352 = pneg %p125
        %s353 = sand.u32 %s141, 1
        %s354 = scalar_lea.sflag [#allocation13], %s353
        %s355 = sand.u32 %s141, 1
        %s356 = scalar_lea.vmem [#allocation12], %s355
        %p357 = pneg %p154
        %p358 = pneg %p151
        %p359 = pneg %p184
        %p360 = pneg %p181
        %s361 = sld [smem:[#allocation6 + %s43]]
        %p362 = scmp.lt.s32.totalorder %s361, 2
        %s363 = scalar_select %p362, %s361, 2
        %p364 = scmp.lt.s32.totalorder %s44, 2
        %s365 = scalar_select %p364, %s44, 2
        %s366 = smul.addr %s363, 3
        %s367 = sadd.s32 %s365, %s366
        %s368 = smul.addr %s367, 4
        %s369 = scalar_lea.vmem %s6, %s368
        %s370 = sld [smem:[#allocation5 + %s43]]
        %s371 = sld [smem:[#allocation6 + %s43]]
        %p372 = scmp.lt.s32.totalorder %s371, 2
        %s373 = scalar_select %p372, %s371, 2
        %p374 = scmp.lt.s32.totalorder %s44, 2
        %s375 = scalar_select %p374, %s44, 2
        %s376 = smul.addr %s373, 3
        %s377 = sadd.s32 %s375, %s376
        %s378 = smul.addr %s377, 4
        %s379 = scalar_lea.vmem %s6, %s378
        %s380 = sld [smem:[#allocation6 + %s43]]
        %s382 = sld [smem:[#allocation6 + %s43]]
        %s383 = ssub.s32 %s43, 1
        %p384 = scmp.gt.s32.totalorder %s383, 0
        %s385 = scalar_select %p384, %s383, 0
        %s386 = sld [smem:[#allocation6 + %s385]]
        %s387 = sadd.s32 %s43, 1
        %p388 = scmp.lt.s32.totalorder %s387, 3
        %s389 = scalar_select %p388, %s387, 3
        %s390 = sld [smem:[#allocation6 + %s389]]
        %p391 = scmp.eq.s32.totalorder %s43, 0
        %p392 = scmp.ne.s32.totalorder %s382, %s386
        %p393 = por %p391, %p392
        %p394 = scmp.eq.s32.totalorder %s43, 3
        %p395 = scmp.ne.s32.totalorder %s382, %s390
        %p396 = por %p394, %p395
        %p397 = scmp.eq.s32.totalorder %s44, 0
        // Predicated region
        $region53: #{hetero_rgcn_forward_pallas.2} parent=35 // pred_check
          %p398 = pneg %p397
        $region54: #{hetero_rgcn_forward_pallas.2} parent=35 // pred_check_branch
          %400 = sbr.rel (%p398) target = $region56
        $region55: #{hetero_rgcn_forward_pallas.2} parent=35 // pred_region
          %v401 = vld [vmem:[%s307] sm:$0xf]
          %v402 = vld [vmem:[%s307 + $0x4] sm:$0xf]
          %v403 = vld [vmem:[%s307 + $0x8] sm:$0xf]
          %v404 = vld [vmem:[%s317] sm:$0xf]
          %v405 = vld [vmem:[%s317 + $0x4] sm:$0xf]
          %v406 = vld [vmem:[%s317 + $0x8] sm:$0xf]
          %v407 = vld [vmem:[%s317 + $0xc] sm:$0xf]
          %v408 = vld [vmem:[%s317 + $0x10] sm:$0xf]
          %v409 = vld [vmem:[%s317 + $0x14] sm:$0xf]
          %v410 = vld [vmem:[%s317 + $0x18] sm:$0xf]
          %v411 = vld [vmem:[%s317 + $0x1c] sm:$0xf]
          %v412 = vld [vmem:[%s317 + $0x20] sm:$0xf]
          %v413 = vld [vmem:[%s317 + $0x24] sm:$0xf]
          %v414 = vld [vmem:[%s317 + $0x28] sm:$0xf]
          %v415 = vld [vmem:[%s317 + $0x2c] sm:$0xf]
          %v416 = vld [vmem:[%s317 + $0x30] sm:$0xf]
          %v417 = vld [vmem:[%s317 + $0x34] sm:$0xf]
          %v418 = vld [vmem:[%s317 + $0x38] sm:$0xf]
          %v419 = vld [vmem:[%s317 + $0x3c] sm:$0xf]
          %v420 = vld [vmem:[%s326] sm:$0x1]
          %v422 = vperm.slane %v420, 0
          %v427 = vunpack.c.l.b16 %v401
          %v428 = vunpack.c.l.b16 %v402
          %v429 = vunpack.c.l.b16 %v403
          %v430 = vpack.c.b16 %v428, %v427
          %v431 = vpack.c.b16 %v429, %v429
          %v450 = vunpack.c.l.b16 %v404
          %v451 = vunpack.c.l.b16 %v405
          %v452 = vunpack.c.l.b16 %v406
          %v453 = vunpack.c.l.b16 %v407
          %v454 = vunpack.c.l.b16 %v408
          %v455 = vunpack.c.l.b16 %v409
          %v456 = vunpack.c.l.b16 %v410
          %v457 = vunpack.c.l.b16 %v411
          %v458 = vunpack.c.l.b16 %v412
          %v459 = vunpack.c.l.b16 %v413
          %v460 = vunpack.c.l.b16 %v414
          %v461 = vunpack.c.l.b16 %v415
          %v462 = vunpack.c.l.b16 %v416
          %v463 = vunpack.c.l.b16 %v417
          %v464 = vunpack.c.l.b16 %v418
          %v465 = vunpack.c.l.b16 %v419
          %v466 = vpack.c.b16 %v451, %v450
          %v467 = vpack.c.b16 %v453, %v452
          %v468 = vpack.c.b16 %v455, %v454
          %v469 = vpack.c.b16 %v457, %v456
          %v470 = vpack.c.b16 %v459, %v458
          %v471 = vpack.c.b16 %v461, %v460
          %v472 = vpack.c.b16 %v463, %v462
          %v473 = vpack.c.b16 %v465, %v464
          %482 = vmatpush.bf16.msra.mxu0 %v473
          %483 = vmatpush.bf16.msra.mxu0 %v472
          %484 = vmatpush.bf16.msra.mxu0 %v471
          %485 = vmatpush.bf16.msra.mxu0 %v470
          %486 = vmatpush.bf16.msra.mxu0 %v469
          %487 = vmatpush.bf16.msra.mxu0 %v468
          %488 = vmatpush.bf16.msra.mxu0 %v467
          %489 = vmatpush.bf16.msra.mxu0 %v466
          %490 = vmatmul.bf16.gmra.mxu0 %v430
          %v491 = vpop.f32.mrf.mxu0
          %v492 = vadd.f32 %v422, %v491
          %v493 = vpop.f32.mrf.mxu0
          %v494 = vadd.f32 %v422, %v493
          %495 = vmatmul.bf16.gmra.mxu0 %v431
          %v496 = vpop.f32.mrf.mxu0
          %v497 = vadd.f32 %v422, %v496
          %v498 = vpop.f32.mrf.mxu0
          %499 = vdwg.mxu0
          %v500 = vpack.c.bf16 %v492, %v492
          %v501 = vpack.c.bf16 %v494, %v494
          %v502 = vpack.c.bf16 %v497, %v497
          %503 = vst [vmem:[#allocation2] sm:$0xf] %v500
          %504 = vst [vmem:[#allocation2 + $0x4] sm:$0xf] %v501
          %505 = vst [vmem:[#allocation2 + $0x8] sm:$0xf] %v502
        $region56: #{hetero_rgcn_forward_pallas.2} parent=35 // pred_fallthru
          _
        %v506 = vld [vmem:[%s297] sm:$0xf]
        %v507 = vld [vmem:[#allocation2] sm:$0xf]
        %v508 = vld [vmem:[#allocation2 + $0x4] sm:$0xf]
        %v509 = vld [vmem:[#allocation2 + $0x8] sm:$0xf]
        %v513 = vunpack.c.l.b16 %v507
        %v514 = vunpack.c.l.b16 %v508
        %v515 = vunpack.c.l.b16 %v509
        %v516 = vpack.c.b16 %v514, %v513
        %v517 = vpack.c.b16 %v515, %v515
        %vm519 = vcmask 195584
        %v521 = vsel %vm519, %v506, 0
        %vm523 = vcmask 1043456
        %v525 = vsel %vm523, %v517, 0
        %527 = vmatpush.bf16.msra.mxu0 0
        %528 = vmatpush.bf16.msra.mxu0 0
        %529 = vmatpush.bf16.msra.mxu0 0
        %530 = vmatpush.bf16.msra.mxu0 0
        %531 = vmatpush.bf16.msra.mxu0 0
        %532 = vmatpush.bf16.msra.mxu0 0
        %533 = vmatpush.bf16.msra.mxu0 %v525
        %534 = vmatpush.bf16.msra.mxu0 %v516
        %535 = vmatmul.bf16.gmra.mxu0 %v521
        %v536 = vpop.f32.mrf.mxu0
        %v537 = vadd.f32 0.0, %v536
        %v538 = vpop.f32.mrf.mxu0
        %539 = vdwg.mxu0
        %s540 = smul.u32 %s44, 8
        // Predicated region
        $region57: #{hetero_rgcn_forward_pallas.2} parent=35 // pred_check
          %p541 = pneg %p393
        $region58: #{hetero_rgcn_forward_pallas.2} parent=35 // pred_check_branch
          %543 = sbr.rel (%p541) target = $region60
        $region59: #{hetero_rgcn_forward_pallas.2} parent=35 // pred_region
          %s544 = scalar_lea.vmem [#allocation3], %s540
          %545 = vst [vmem:[%s544] sm:$0xff] %v537
        $region60: #{hetero_rgcn_forward_pallas.2} parent=35 // pred_fallthru
          _
        %p546 = pneg %p393
        // Predicated region
        $region61: #{hetero_rgcn_forward_pallas.2} parent=35 // pred_check
          _
        $region62: #{hetero_rgcn_forward_pallas.2} parent=35 // pred_check_branch
          %548 = sbr.rel (%p393) target = $region64
        $region63: #{hetero_rgcn_forward_pallas.2} parent=35 // pred_region
          %s549 = scalar_lea.vmem [#allocation3], %s540
          %v550 = vld [vmem:[%s549] sm:$0xff]
          %v551 = vadd.f32 %v550, %v537
          %552 = vst [vmem:[%s549] sm:$0xff] %v551
        $region64: #{hetero_rgcn_forward_pallas.2} parent=35 // pred_fallthru
          _
        // Predicated region
        $region65: #{hetero_rgcn_forward_pallas.2} parent=35 // pred_check
          %p553 = pneg %p396
        $region66: #{hetero_rgcn_forward_pallas.2} parent=35 // pred_check_branch
          %555 = sbr.rel (%p553) target = $region68
        $region67: #{hetero_rgcn_forward_pallas.2} parent=35 // pred_region
          %s556 = scalar_lea.vmem [#allocation3], %s540
          %v557 = vld [vmem:[%s556] sm:$0xff]
          %vm558 = vcmp.ge.f32.partialorder %v557, 0.0
          %v559 = vmul.f32 %v557, 0.01
          %v560 = vsel %vm558, %v557, %v559
          %v561 = vpack.c.bf16 %v560, %v560
          %562 = vst [vmem:[%s379] sm:$0xf] %v561
        $region68: #{hetero_rgcn_forward_pallas.2} parent=35 // pred_fallthru
          _
        %s563 = sld [smem:[#allocation6 + %s43]]
        %p564 = scmp.lt.s32.totalorder %s563, 2
        %s565 = scalar_select %p564, %s563, 2
        %p566 = scmp.lt.s32.totalorder %s44, 2
        %s567 = scalar_select %p566, %s44, 2
        %s568 = smul.addr %s565, 3
        %s569 = sadd.s32 %s567, %s568
        %s570 = smul.addr %s569, 4
        %s571 = scalar_lea.vmem %s6, %s570
        // Predicated region
        $region69: #{hetero_rgcn_forward_pallas.2} parent=35 // pred_check
          %p572 = pneg %p181
        $region70: #{hetero_rgcn_forward_pallas.2} parent=35 // pred_check_branch
          %574 = sbr.rel (%p572) target = $region72
        $region71: #{hetero_rgcn_forward_pallas.2} parent=35 // pred_region
          %s575 = sld [smem:[#allocation6 + %s43]]
        $region72: #{hetero_rgcn_forward_pallas.2} parent=35 // pred_fallthru
          _
      $region36: #{hetero_rgcn_forward_pallas.2} parent=5 // pred_fallthru
        _
      %p576 = scmp.le.s32.totalorder 2, %s34
      // Predicated region
      $region73: #{hetero_rgcn_forward_pallas.2} parent=5 // pred_check
        %p577 = pneg %p576
      $region74: #{hetero_rgcn_forward_pallas.2} parent=5 // pred_check_branch
        %579 = sbr.rel (%p577) target = $region76
      $region75: #{hetero_rgcn_forward_pallas.2} parent=5 // pred_region
        %s580 = ssub.s32 %s34, 2
        // Predicated region
        $region77: #{hetero_rgcn_forward_pallas.2} parent=75 // pred_check
          %p581 = pneg %p187
        $region78: #{hetero_rgcn_forward_pallas.2} parent=75 // pred_check_branch
          %583 = sbr.rel (%p581) target = $region80
        $region79: #{hetero_rgcn_forward_pallas.2} parent=75 // pred_region
          %s584 = sld [smem:[#allocation6 + %s45]]
          %p585 = scmp.lt.s32.totalorder %s584, 2
          %s586 = scalar_select %p585, %s584, 2
          %p587 = scmp.lt.s32.totalorder %s46, 2
          %s588 = scalar_select %p587, %s46, 2
          %s589 = smul.addr %s586, 3
          %s590 = sadd.s32 %s588, %s589
          %s591 = smul.addr %s590, 4
          %s592 = scalar_lea.vmem %s6, %s591
        $region80: #{hetero_rgcn_forward_pallas.2} parent=75 // pred_fallthru
          _
      $region76: #{hetero_rgcn_forward_pallas.2} parent=5 // pred_fallthru
        _
    $region6: #{hetero_rgcn_forward_pallas.2} parent=1 // loop_footer
      %s38 = sadd.s32 1, %s34
    $region7: #{hetero_rgcn_forward_pallas.2} parent=1 // loop_footer_branch
      %33 = sbr.rel target = $region3
    $region8: #{hetero_rgcn_forward_pallas.2} parent=1 // loop_exit
      _
    %593 = vsyncpa [#allocation8], 1
    %s594 = scalar_lea.sflag [#allocation8], 1
    %595 = vsyncpa %s594, 1
    %596 = vsyncpa [#allocation10], 1
    %s597 = scalar_lea.sflag [#allocation10], 1
    %598 = vsyncpa %s597, 1
    %599 = vsyncpa [#allocation13], 1
    %s600 = scalar_lea.sflag [#allocation13], 1
    %601 = vsyncpa %s600, 1

// kernel: hetero_rgcn_forward_pallas.3
$region0: #{hetero_rgcn_forward_pallas.3}
  #allocation0 [shape = 'u32[]', space=smem, size = 0x4, offset = 0x4, fixed_abs, tag = 'smem constant byte address 0x4 - core index']
  #allocation1 [shape = 'u32[72,128]{1,0:T(1,128)}', space=vmem, size = 0x9000, scoped, tag = 'internal scratch']
  #allocation2 [shape = 'bf16[24,128]{1,0:T(8,128)(2,1)}', space=vmem, size = 0x1800, scoped, tag = 'scratch operand']
  #allocation3 [shape = 'f32[24,128]{1,0:T(8,128)}', space=vmem, size = 0x3000, scoped, tag = 'scratch operand']
  #allocation4 [shape = 's32[1]{0}', space=sflag, size = 0x4, scoped, tag = 'scoped memory for hetero_rgcn_forward_pallas.3']
  #allocation5 [shape = 'u8[512]{0}', space=smem, size = 0x200, scoped, tag = 'prefetched SMEM operand 0']
  #allocation6 [shape = 'u8[512]{0}', space=smem, size = 0x200, scoped, tag = 'prefetched SMEM operand 1']
  %s0 = inlined_call_operand.vmem [shape: s32[4], index: 0, kind: input, shape index: {}]
  %s1 = inlined_call_operand.vmem [shape: s32[4], index: 1, kind: input, shape index: {}]
  %s2 = inlined_call_operand.hbm [shape: bf16[4,24,24], index: 2, kind: input, shape index: {}]
  %s3 = inlined_call_operand.vmem [shape: bf16[3,24,128], index: 3, kind: input, shape index: {}]
  %s4 = inlined_call_operand.hbm [shape: bf16[4,128,128], index: 4, kind: input, shape index: {}]
  %s5 = inlined_call_operand.vmem [shape: f32[4,1,128], index: 5, kind: input, shape index: {}]
  %s6 = inlined_call_operand.hbm [shape: f32[3,24,128], index: 6, kind: output, shape index: {}]
  %s7 = sld [smem:[#allocation0]]
  $region73: #{hetero_rgcn_forward_pallas.3} parent=0
    _
  %s9 = ssub.s32 1, %s7
  %s10 = scalar_select 0, %s9, %s7
  %s12 = sshll.u32 %s0, 4
  %s13 = int_to_ptr.vmem [resolvable:$true] %s12
  %15 = dma.vmem_to_smem %s13, 16, [#allocation5], [#allocation4]
  %s17 = sshll.u32 %s1, 4
  %s18 = int_to_ptr.vmem [resolvable:$true] %s17
  %20 = dma.vmem_to_smem %s18, 16, [#allocation6], [#allocation4]
  %22 = dma.done [#allocation4], 32
  %23 = sfence
  $region1: #{hetero_rgcn_forward_pallas.3} parent=0
    #allocation7 [shape = 'u8[4096]{0}', space=vmem, size = 0x1000, scoped, tag = 'input window, operand 2']
    #allocation8 [shape = 's32[2]{0}', space=sflag, size = 0x8, scoped, tag = 'scoped memory for hetero_rgcn_forward_pallas.3']
    #allocation9 [shape = 's32[2]{0}', space=sflag, size = 0x8, scoped, tag = 'scoped memory for hetero_rgcn_forward_pallas.3']
    #allocation10 [shape = 'u8[65536]{0}', space=vmem, size = 0x10000, scoped, tag = 'input window, operand 4']
    #allocation11 [shape = 's32[2]{0}', space=sflag, size = 0x8, scoped, tag = 'scoped memory for hetero_rgcn_forward_pallas.3']
    #allocation12 [shape = 'u8[8192]{0}', space=vmem, size = 0x2000, scoped, tag = 'output window, operand 0']
    %24 = vsyncpa [#allocation8], 0
    %s25 = scalar_lea.sflag [#allocation8], 1
    %26 = vsyncpa %s25, 0
    %27 = vsyncpa [#allocation11], 0
    %s28 = scalar_lea.sflag [#allocation11], 1
    %29 = vsyncpa %s28, 0
    %30 = vsyncpa [#allocation9], 0
    %s31 = scalar_lea.sflag [#allocation9], 1
    %32 = vsyncpa %s31, 0
    loop: start=0, step=1, limit=14
    $region2: #{hetero_rgcn_forward_pallas.3} parent=1 // loop_pre_header
      _
    $region3: #{hetero_rgcn_forward_pallas.3} parent=1 // loop_header
      %s34 = sphi 0, %s38
      %p35 = scmp.ge.s32.totalorder %s34, 14
      %s41 = sphi 0, %s53
      %s42 = sphi 0, %s49
      %s43 = sphi 0, %s41
      %s44 = sphi 0, %s42
      %s45 = sphi 0, %s43
      %s46 = sphi 0, %s44
      %s58 = sphi 0, %s60
      %s61 = sphi 0, %s58
      %s62 = sphi 0, %s61
      %s78 = sphi 0, %s62
      %s86 = sphi 0, %s88
      %s89 = sphi 0, %s86
      %s90 = sphi 0, %s89
      %s106 = sphi 0, %s90
      %s112 = sphi 0, %s114
      %s115 = sphi 0, %s112
      %s116 = sphi 0, %s115
      %s132 = sphi 0, %s116
      %s138 = sphi 0, %s140
      %s141 = sphi 0, %s138
      %s142 = sphi 0, %s141
      %s158 = sphi 0, %s142
      %s168 = sphi 0, %s170
      %s171 = sphi 0, %s168
      %s172 = sphi 0, %s171
      %s188 = sphi 0, %s172
    $region4: #{hetero_rgcn_forward_pallas.3} parent=1 // loop_header_branch
      %37 = sbr.rel (%p35) target = $region8
    $region5: #{hetero_rgcn_forward_pallas.3} parent=1 // loop_body
      %s39 = ssub.s32 %s34, 1
      %s40 = ssub.s32 %s34, 2
      %s47 = sadd.s32 1, %s42
      %p48 = scmp.ge.s32.totalorder %s47, 3
      %s49 = scalar_select %p48, 0, %s47
      %s50 = sadd.s32 1, %s41
      %s51 = scalar_select %p48, %s50, %s41
      %p52 = scmp.ge.s32.totalorder %s51, 4
      %s53 = scalar_select %p52, 0, %s51
      %s54 = ssub.s32 %s41, %s53
      %s55 = ssub.s32 %s42, %s49
      %s56 = sor.u32 %s54, %s55
      %p57 = scmp.eq.s32.totalorder %s56, 0
      %s59 = sadd.s32 %s58, 1
      %s60 = scalar_select %p57, %s58, %s59
      %p63 = pneg %p57
      %p64 = scmp.eq.s32.totalorder %s34, 11
      %p65 = por %p63, %p64
      %p66 = scmp.ne.s32.totalorder %s58, %s61
      %p67 = scmp.eq.s32.totalorder %s34, 0
      %p68 = por %p66, %p67
      %p69 = scmp.ne.s32.totalorder %s58, %s61
      %p70 = scmp.eq.s32.totalorder %s39, 11
      %p71 = por %p69, %p70
      %p72 = scmp.ne.s32.totalorder %s61, %s62
      %p73 = scmp.eq.s32.totalorder %s39, 0
      %p74 = por %p72, %p73
      %p75 = scmp.ne.s32.totalorder %s61, %s62
      %p76 = scmp.eq.s32.totalorder %s40, 11
      %p77 = por %p75, %p76
      %p79 = scmp.ne.s32.totalorder %s62, %s78
      %p80 = scmp.eq.s32.totalorder %s40, 0
      %p81 = por %p79, %p80
      %s82 = sld [smem:[#allocation5 + %s41]]
      %s83 = sld [smem:[#allocation5 + %s53]]
      %s84 = ssub.s32 %s82, %s83
      %p85 = scmp.eq.s32.totalorder %s84, 0
      %s87 = sadd.s32 %s86, 1
      %s88 = scalar_select %p85, %s86, %s87
      %p91 = pneg %p85
      %p92 = scmp.eq.s32.totalorder %s34, 11
      %p93 = por %p91, %p92
      %p94 = scmp.ne.s32.totalorder %s86, %s89
      %p95 = scmp.eq.s32.totalorder %s34, 0
      %p96 = por %p94, %p95
      %p97 = scmp.ne.s32.totalorder %s86, %s89
      %p98 = scmp.eq.s32.totalorder %s39, 11
      %p99 = por %p97, %p98
      %p100 = scmp.ne.s32.totalorder %s89, %s90
      %p101 = scmp.eq.s32.totalorder %s39, 0
      %p102 = por %p100, %p101
      %p103 = scmp.ne.s32.totalorder %s89, %s90
      %p104 = scmp.eq.s32.totalorder %s40, 11
      %p105 = por %p103, %p104
      %p107 = scmp.ne.s32.totalorder %s90, %s106
      %p108 = scmp.eq.s32.totalorder %s40, 0
      %p109 = por %p107, %p108
      %s110 = ssub.s32 %s41, %s53
      %p111 = scmp.eq.s32.totalorder %s110, 0
      %s113 = sadd.s32 %s112, 1
      %s114 = scalar_select %p111, %s112, %s113
      %p117 = pneg %p111
      %p118 = scmp.eq.s32.totalorder %s34, 11
      %p119 = por %p117, %p118
      %p120 = scmp.ne.s32.totalorder %s112, %s115
      %p121 = scmp.eq.s32.totalorder %s34, 0
      %p122 = por %p120, %p121
      %p123 = scmp.ne.s32.totalorder %s112, %s115
      %p124 = scmp.eq.s32.totalorder %s39, 11
      %p125 = por %p123, %p124
      %p126 = scmp.ne.s32.totalorder %s115, %s116
      %p127 = scmp.eq.s32.totalorder %s39, 0
      %p128 = por %p126, %p127
      %p129 = scmp.ne.s32.totalorder %s115, %s116
      %p130 = scmp.eq.s32.totalorder %s40, 11
      %p131 = por %p129, %p130
      %p133 = scmp.ne.s32.totalorder %s116, %s132
      %p134 = scmp.eq.s32.totalorder %s40, 0
      %p135 = por %p133, %p134
      %s136 = ssub.s32 %s41, %s53
      %p137 = scmp.eq.s32.totalorder %s136, 0
      %s139 = sadd.s32 %s138, 1
      %s140 = scalar_select %p137, %s138, %s139
      %p143 = pneg %p137
      %p144 = scmp.eq.s32.totalorder %s34, 11
      %p145 = por %p143, %p144
      %p146 = scmp.ne.s32.totalorder %s138, %s141
      %p147 = scmp.eq.s32.totalorder %s34, 0
      %p148 = por %p146, %p147
      %p149 = scmp.ne.s32.totalorder %s138, %s141
      %p150 = scmp.eq.s32.totalorder %s39, 11
      %p151 = por %p149, %p150
      %p152 = scmp.ne.s32.totalorder %s141, %s142
      %p153 = scmp.eq.s32.totalorder %s39, 0
      %p154 = por %p152, %p153
      %p155 = scmp.ne.s32.totalorder %s141, %s142
      %p156 = scmp.eq.s32.totalorder %s40, 11
      %p157 = por %p155, %p156
      %p159 = scmp.ne.s32.totalorder %s142, %s158
      %p160 = scmp.eq.s32.totalorder %s40, 0
      %p161 = por %p159, %p160
      %s162 = sld [smem:[#allocation6 + %s41]]
      %s163 = sld [smem:[#allocation6 + %s53]]
      %s164 = ssub.s32 %s162, %s163
      %s165 = ssub.s32 %s42, %s49
      %s166 = sor.u32 %s164, %s165
      %p167 = scmp.eq.s32.totalorder %s166, 0
      %s169 = sadd.s32 %s168, 1
      %s170 = scalar_select %p167, %s168, %s169
      %p173 = pneg %p167
      %p174 = scmp.eq.s32.totalorder %s34, 11
      %p175 = por %p173, %p174
      %p176 = scmp.ne.s32.totalorder %s168, %s171
      %p177 = scmp.eq.s32.totalorder %s34, 0
      %p178 = por %p176, %p177
      %p179 = scmp.ne.s32.totalorder %s168, %s171
      %p180 = scmp.eq.s32.totalorder %s39, 11
      %p181 = por %p179, %p180
      %p182 = scmp.ne.s32.totalorder %s171, %s172
      %p183 = scmp.eq.s32.totalorder %s39, 0
      %p184 = por %p182, %p183
      %p185 = scmp.ne.s32.totalorder %s171, %s172
      %p186 = scmp.eq.s32.totalorder %s40, 11
      %p187 = por %p185, %p186
      %p189 = scmp.ne.s32.totalorder %s172, %s188
      %p190 = scmp.eq.s32.totalorder %s40, 0
      %p191 = por %p189, %p190
      %p192 = scmp.le.s32.totalorder 1, %s34
      %p193 = scmp.lt.s32.totalorder %s34, 13
      %p194 = pnand %p192, %p193
      %p195 = pneg %p194
      // Predicated region
      $region9: #{hetero_rgcn_forward_pallas.3} parent=5 // pred_check
        _
      $region10: #{hetero_rgcn_forward_pallas.3} parent=5 // pred_check_branch
        %197 = sbr.rel (%p194) target = $region12
      $region11: #{hetero_rgcn_forward_pallas.3} parent=5 // pred_region
        %s198 = ssub.s32 %s34, 1
      $region12: #{hetero_rgcn_forward_pallas.3} parent=5 // pred_fallthru
        _
      %p199 = scmp.lt.s32.totalorder %s34, 12
      // Predicated region
      $region13: #{hetero_rgcn_forward_pallas.3} parent=5 // pred_check
        %p200 = pneg %p199
      $region14: #{hetero_rgcn_forward_pallas.3} parent=5 // pred_check_branch
        %202 = sbr.rel (%p200) target = $region16
      $region15: #{hetero_rgcn_forward_pallas.3} parent=5 // pred_region
        // Predicated region
        $region17: #{hetero_rgcn_forward_pallas.3} parent=15 // pred_check
          %p203 = pneg %p68
        $region18: #{hetero_rgcn_forward_pallas.3} parent=15 // pred_check_branch
          %205 = sbr.rel (%p203) target = $region20
        $region19: #{hetero_rgcn_forward_pallas.3} parent=15 // pred_region
          %s206 = sand.u32 %s58, 1
          %s207 = scalar_lea.sflag [#allocation8], %s206
          %s208 = sand.u32 %s58, 1
          %s209 = smul.addr %s208, 4
          %s210 = scalar_lea.vmem [#allocation7], %s209
          %212 = vsyncadd %s207, 0
          %s213 = smul.addr %s41, 3
          %s214 = sadd.s32 %s42, %s213
          %s215 = smul.addr %s214, 4
          %s216 = scalar_lea.hbm %s2, %s215
          %s218 = sshll.u32 %s216, 4
          %s219 = int_to_ptr.hbm [resolvable:$true] %s218
          %s220 = sshll.u32 %s210, 4
          %s221 = int_to_ptr.vmem [resolvable:$true] %s220
          %223 = dma.hbm_to_vmem [thread:$0]  %s219, 64, %s221, %s207
        $region20: #{hetero_rgcn_forward_pallas.3} parent=15 // pred_fallthru
          _
        // Predicated region
        $region21: #{hetero_rgcn_forward_pallas.3} parent=15 // pred_check
          %p224 = pneg %p96
        $region22: #{hetero_rgcn_forward_pallas.3} parent=15 // pred_check_branch
          %226 = sbr.rel (%p224) target = $region24
        $region23: #{hetero_rgcn_forward_pallas.3} parent=15 // pred_region
          %s227 = sld [smem:[#allocation5 + %s41]]
          %p228 = scmp.lt.s32.totalorder %s227, 2
          %s229 = scalar_select %p228, %s227, 2
          %s230 = smul.addr %s229, 3
          %s231 = smul.addr %s230, 4
          %s232 = scalar_lea.vmem %s3, %s231
          %s233 = sld [smem:[#allocation5 + %s41]]
        $region24: #{hetero_rgcn_forward_pallas.3} parent=15 // pred_fallthru
          _
        // Predicated region
        $region25: #{hetero_rgcn_forward_pallas.3} parent=15 // pred_check
          %p234 = pneg %p122
        $region26: #{hetero_rgcn_forward_pallas.3} parent=15 // pred_check_branch
          %236 = sbr.rel (%p234) target = $region28
        $region27: #{hetero_rgcn_forward_pallas.3} parent=15 // pred_region
          %s237 = sand.u32 %s112, 1
          %s238 = scalar_lea.sflag [#allocation11], %s237
          %s239 = sand.u32 %s112, 1
          %s240 = smul.addr %s239, 64
          %s241 = scalar_lea.vmem [#allocation10], %s240
          %243 = vsyncadd %s238, 0
          %s244 = smul.addr %s41, 16
          %s245 = smul.addr %s244, 4
          %s246 = scalar_lea.hbm %s4, %s245
          %s247 = sshll.u32 %s246, 4
          %s248 = int_to_ptr.hbm [resolvable:$true] %s247
          %s249 = sshll.u32 %s241, 4
          %s250 = int_to_ptr.vmem [resolvable:$true] %s249
          %255 = dma.hbm_to_vmem [thread:$0]  %s248, 1024, %s250, %s238, 64, 64, 4
        $region28: #{hetero_rgcn_forward_pallas.3} parent=15 // pred_fallthru
          _
        // Predicated region
        $region29: #{hetero_rgcn_forward_pallas.3} parent=15 // pred_check
          %p256 = pneg %p148
        $region30: #{hetero_rgcn_forward_pallas.3} parent=15 // pred_check_branch
          %258 = sbr.rel (%p256) target = $region32
        $region31: #{hetero_rgcn_forward_pallas.3} parent=15 // pred_region
          %p259 = scmp.lt.s32.totalorder %s41, 3
          %s260 = scalar_select %p259, %s41, 3
          %s261 = scalar_lea.vmem %s5, %s260
        $region32: #{hetero_rgcn_forward_pallas.3} parent=15 // pred_fallthru
          _
      $region16: #{hetero_rgcn_forward_pallas.3} parent=5 // pred_fallthru
        _
      %p262 = scmp.le.s32.totalorder 1, %s34
      %p263 = scmp.lt.s32.totalorder %s34, 13
      %p264 = pnand %p262, %p263
      %p265 = pneg %p264
      // Predicated region
      $region33: #{hetero_rgcn_forward_pallas.3} parent=5 // pred_check
        _
      $region34: #{hetero_rgcn_forward_pallas.3} parent=5 // pred_check_branch
        %267 = sbr.rel (%p264) target = $region36
      $region35: #{hetero_rgcn_forward_pallas.3} parent=5 // pred_region
        %s268 = ssub.s32 %s34, 1
        %s269 = sand.u32 %s61, 1
        %s270 = scalar_lea.sflag [#allocation8], %s269
        %s271 = sand.u32 %s61, 1
        %s272 = smul.addr %s271, 4
        %s273 = scalar_lea.vmem [#allocation7], %s272
        // Predicated region
        $region37: #{hetero_rgcn_forward_pallas.3} parent=35 // pred_check
          %p274 = pneg %p74
        $region38: #{hetero_rgcn_forward_pallas.3} parent=35 // pred_check_branch
          %276 = sbr.rel (%p274) target = $region40
        $region39: #{hetero_rgcn_forward_pallas.3} parent=35 // pred_region
          %278 = dma.done %s270, 64
        $region40: #{hetero_rgcn_forward_pallas.3} parent=35 // pred_fallthru
          _
        %s279 = sand.u32 %s115, 1
        %s280 = scalar_lea.sflag [#allocation11], %s279
        %s281 = sand.u32 %s115, 1
        %s282 = smul.addr %s281, 64
        %s283 = scalar_lea.vmem [#allocation10], %s282
        // Predicated region
        $region41: #{hetero_rgcn_forward_pallas.3} parent=35 // pred_check
          %p284 = pneg %p128
        $region42: #{hetero_rgcn_forward_pallas.3} parent=35 // pred_check_branch
          %286 = sbr.rel (%p284) target = $region44
        $region43: #{hetero_rgcn_forward_pallas.3} parent=35 // pred_region
          %288 = dma.done %s280, 1024
        $region44: #{hetero_rgcn_forward_pallas.3} parent=35 // pred_fallthru
          _
        %s289 = sand.u32 %s61, 1
        %s290 = scalar_lea.sflag [#allocation8], %s289
        %s291 = sand.u32 %s61, 1
        %s292 = smul.addr %s291, 4
        %s293 = scalar_lea.vmem [#allocation7], %s292
        %p294 = pneg %p74
        %p295 = pneg %p71
        %s296 = sld [smem:[#allocation5 + %s43]]
        %p297 = scmp.lt.s32.totalorder %s296, 2
        %s298 = scalar_select %p297, %s296, 2
        %s299 = smul.addr %s298, 3
        %s300 = smul.addr %s299, 4
        %s301 = scalar_lea.vmem %s3, %s300
        %p302 = pneg %p102
        %p303 = pneg %p99
        %s304 = sand.u32 %s115, 1
        %s305 = scalar_lea.sflag [#allocation11], %s304
        %s306 = sand.u32 %s115, 1
        %s307 = smul.addr %s306, 64
        %s308 = scalar_lea.vmem [#allocation10], %s307
        %p309 = pneg %p128
        %p310 = pneg %p125
        %p311 = scmp.lt.s32.totalorder %s43, 3
        %s312 = scalar_select %p311, %s43, 3
        %s313 = scalar_lea.vmem %s5, %s312
        %p314 = pneg %p154
        %p315 = pneg %p151
        %p316 = pneg %p184
        %p317 = pneg %p181
        %s318 = sand.u32 %s171, 1
        %s319 = scalar_lea.sflag [#allocation9], %s318
        %s320 = sand.u32 %s171, 1
        %s321 = smul.addr %s320, 8
        %s322 = scalar_lea.vmem [#allocation12], %s321
        %s323 = sld [smem:[#allocation5 + %s43]]
        %p324 = scmp.lt.s32.totalorder %s323, 2
        %s325 = scalar_select %p324, %s323, 2
        %s326 = smul.addr %s325, 3
        %s327 = smul.addr %s326, 4
        %s328 = scalar_lea.vmem %s3, %s327
        %s329 = sld [smem:[#allocation5 + %s43]]
        %p330 = scmp.lt.s32.totalorder %s43, 3
        %s331 = scalar_select %p330, %s43, 3
        %s332 = scalar_lea.vmem %s5, %s331
        %s333 = sld [smem:[#allocation6 + %s43]]
        %s335 = sld [smem:[#allocation6 + %s43]]
        %s336 = ssub.s32 %s43, 1
        %p337 = scmp.gt.s32.totalorder %s336, 0
        %s338 = scalar_select %p337, %s336, 0
        %s339 = sld [smem:[#allocation6 + %s338]]
        %s340 = sadd.s32 %s43, 1
        %p341 = scmp.lt.s32.totalorder %s340, 3
        %s342 = scalar_select %p341, %s340, 3
        %s343 = sld [smem:[#allocation6 + %s342]]
        %p344 = scmp.eq.s32.totalorder %s43, 0
        %p345 = scmp.ne.s32.totalorder %s335, %s339
        %p346 = por %p344, %p345
        %p347 = scmp.eq.s32.totalorder %s43, 3
        %p348 = scmp.ne.s32.totalorder %s335, %s343
        %p349 = por %p347, %p348
        %p350 = scmp.eq.s32.totalorder %s44, 0
        // Predicated region
        $region45: #{hetero_rgcn_forward_pallas.3} parent=35 // pred_check
          %p351 = pneg %p350
        $region46: #{hetero_rgcn_forward_pallas.3} parent=35 // pred_check_branch
          %353 = sbr.rel (%p351) target = $region48
        $region47: #{hetero_rgcn_forward_pallas.3} parent=35 // pred_region
          %v354 = vld [vmem:[%s328] sm:$0xf]
          %v355 = vld [vmem:[%s328 + $0x4] sm:$0xf]
          %v356 = vld [vmem:[%s328 + $0x8] sm:$0xf]
          %v357 = vld [vmem:[%s283] sm:$0xf]
          %v358 = vld [vmem:[%s283 + $0x4] sm:$0xf]
          %v359 = vld [vmem:[%s283 + $0x8] sm:$0xf]
          %v360 = vld [vmem:[%s283 + $0xc] sm:$0xf]
          %v361 = vld [vmem:[%s283 + $0x10] sm:$0xf]
          %v362 = vld [vmem:[%s283 + $0x14] sm:$0xf]
          %v363 = vld [vmem:[%s283 + $0x18] sm:$0xf]
          %v364 = vld [vmem:[%s283 + $0x1c] sm:$0xf]
          %v365 = vld [vmem:[%s283 + $0x20] sm:$0xf]
          %v366 = vld [vmem:[%s283 + $0x24] sm:$0xf]
          %v367 = vld [vmem:[%s283 + $0x28] sm:$0xf]
          %v368 = vld [vmem:[%s283 + $0x2c] sm:$0xf]
          %v369 = vld [vmem:[%s283 + $0x30] sm:$0xf]
          %v370 = vld [vmem:[%s283 + $0x34] sm:$0xf]
          %v371 = vld [vmem:[%s283 + $0x38] sm:$0xf]
          %v372 = vld [vmem:[%s283 + $0x3c] sm:$0xf]
          %v373 = vld [vmem:[%s332] sm:$0x1]
          %v375 = vperm.slane %v373, 0
          %v380 = vunpack.c.l.b16 %v354
          %v381 = vunpack.c.l.b16 %v355
          %v382 = vunpack.c.l.b16 %v356
          %v383 = vpack.c.b16 %v381, %v380
          %v384 = vpack.c.b16 %v382, %v382
          %v403 = vunpack.c.l.b16 %v357
          %v404 = vunpack.c.l.b16 %v358
          %v405 = vunpack.c.l.b16 %v359
          %v406 = vunpack.c.l.b16 %v360
          %v407 = vunpack.c.l.b16 %v361
          %v408 = vunpack.c.l.b16 %v362
          %v409 = vunpack.c.l.b16 %v363
          %v410 = vunpack.c.l.b16 %v364
          %v411 = vunpack.c.l.b16 %v365
          %v412 = vunpack.c.l.b16 %v366
          %v413 = vunpack.c.l.b16 %v367
          %v414 = vunpack.c.l.b16 %v368
          %v415 = vunpack.c.l.b16 %v369
          %v416 = vunpack.c.l.b16 %v370
          %v417 = vunpack.c.l.b16 %v371
          %v418 = vunpack.c.l.b16 %v372
          %v419 = vpack.c.b16 %v404, %v403
          %v420 = vpack.c.b16 %v406, %v405
          %v421 = vpack.c.b16 %v408, %v407
          %v422 = vpack.c.b16 %v410, %v409
          %v423 = vpack.c.b16 %v412, %v411
          %v424 = vpack.c.b16 %v414, %v413
          %v425 = vpack.c.b16 %v416, %v415
          %v426 = vpack.c.b16 %v418, %v417
          %435 = vmatpush.bf16.msra.mxu0 %v426
          %436 = vmatpush.bf16.msra.mxu0 %v425
          %437 = vmatpush.bf16.msra.mxu0 %v424
          %438 = vmatpush.bf16.msra.mxu0 %v423
          %439 = vmatpush.bf16.msra.mxu0 %v422
          %440 = vmatpush.bf16.msra.mxu0 %v421
          %441 = vmatpush.bf16.msra.mxu0 %v420
          %442 = vmatpush.bf16.msra.mxu0 %v419
          %443 = vmatmul.bf16.gmra.mxu0 %v383
          %v444 = vpop.f32.mrf.mxu0
          %v445 = vadd.f32 %v375, %v444
          %v446 = vpop.f32.mrf.mxu0
          %v447 = vadd.f32 %v375, %v446
          %448 = vmatmul.bf16.gmra.mxu0 %v384
          %v449 = vpop.f32.mrf.mxu0
          %v450 = vadd.f32 %v375, %v449
          %v451 = vpop.f32.mrf.mxu0
          %452 = vdwg.mxu0
          %v453 = vpack.c.bf16 %v445, %v445
          %v454 = vpack.c.bf16 %v447, %v447
          %v455 = vpack.c.bf16 %v450, %v450
          %456 = vst [vmem:[#allocation2] sm:$0xf] %v453
          %457 = vst [vmem:[#allocation2 + $0x4] sm:$0xf] %v454
          %458 = vst [vmem:[#allocation2 + $0x8] sm:$0xf] %v455
        $region48: #{hetero_rgcn_forward_pallas.3} parent=35 // pred_fallthru
          _
        %v459 = vld [vmem:[%s273] sm:$0xf]
        %v460 = vld [vmem:[#allocation2] sm:$0xf]
        %v461 = vld [vmem:[#allocation2 + $0x4] sm:$0xf]
        %v462 = vld [vmem:[#allocation2 + $0x8] sm:$0xf]
        %v466 = vunpack.c.l.b16 %v460
        %v467 = vunpack.c.l.b16 %v461
        %v468 = vunpack.c.l.b16 %v462
        %v469 = vpack.c.b16 %v467, %v466
        %v470 = vpack.c.b16 %v468, %v468
        %vm472 = vcmask 195584
        %v474 = vsel %vm472, %v459, 0
        %vm476 = vcmask 1043456
        %v478 = vsel %vm476, %v470, 0
        %480 = vmatpush.bf16.msra.mxu0 0
        %481 = vmatpush.bf16.msra.mxu0 0
        %482 = vmatpush.bf16.msra.mxu0 0
        %483 = vmatpush.bf16.msra.mxu0 0
        %484 = vmatpush.bf16.msra.mxu0 0
        %485 = vmatpush.bf16.msra.mxu0 0
        %486 = vmatpush.bf16.msra.mxu0 %v478
        %487 = vmatpush.bf16.msra.mxu0 %v469
        %488 = vmatmul.bf16.gmra.mxu0 %v474
        %v489 = vpop.f32.mrf.mxu0
        %v490 = vadd.f32 0.0, %v489
        %v491 = vpop.f32.mrf.mxu0
        %492 = vdwg.mxu0
        %s493 = smul.u32 %s44, 8
        // Predicated region
        $region49: #{hetero_rgcn_forward_pallas.3} parent=35 // pred_check
          %p494 = pneg %p346
        $region50: #{hetero_rgcn_forward_pallas.3} parent=35 // pred_check_branch
          %496 = sbr.rel (%p494) target = $region52
        $region51: #{hetero_rgcn_forward_pallas.3} parent=35 // pred_region
          %s497 = scalar_lea.vmem [#allocation3], %s493
          %498 = vst [vmem:[%s497] sm:$0xff] %v490
        $region52: #{hetero_rgcn_forward_pallas.3} parent=35 // pred_fallthru
          _
        %p499 = pneg %p346
        // Predicated region
        $region53: #{hetero_rgcn_forward_pallas.3} parent=35 // pred_check
          _
        $region54: #{hetero_rgcn_forward_pallas.3} parent=35 // pred_check_branch
          %501 = sbr.rel (%p346) target = $region56
        $region55: #{hetero_rgcn_forward_pallas.3} parent=35 // pred_region
          %s502 = scalar_lea.vmem [#allocation3], %s493
          %v503 = vld [vmem:[%s502] sm:$0xff]
          %v504 = vadd.f32 %v503, %v490
          %505 = vst [vmem:[%s502] sm:$0xff] %v504
        $region56: #{hetero_rgcn_forward_pallas.3} parent=35 // pred_fallthru
          _
        // Predicated region
        $region57: #{hetero_rgcn_forward_pallas.3} parent=35 // pred_check
          %p506 = pneg %p349
        $region58: #{hetero_rgcn_forward_pallas.3} parent=35 // pred_check_branch
          %508 = sbr.rel (%p506) target = $region60
        $region59: #{hetero_rgcn_forward_pallas.3} parent=35 // pred_region
          %s509 = scalar_lea.vmem [#allocation3], %s493
          %v510 = vld [vmem:[%s509] sm:$0xff]
          %511 = vst [vmem:[%s322] sm:$0xff] %v510
        $region60: #{hetero_rgcn_forward_pallas.3} parent=35 // pred_fallthru
          _
        %s512 = sand.u32 %s171, 1
        %s513 = scalar_lea.sflag [#allocation9], %s512
        %s514 = sand.u32 %s171, 1
        %s515 = smul.addr %s514, 8
        %s516 = scalar_lea.vmem [#allocation12], %s515
        // Predicated region
        $region61: #{hetero_rgcn_forward_pallas.3} parent=35 // pred_check
          %p517 = pneg %p181
        $region62: #{hetero_rgcn_forward_pallas.3} parent=35 // pred_check_branch
          %519 = sbr.rel (%p517) target = $region64
        $region63: #{hetero_rgcn_forward_pallas.3} parent=35 // pred_region
          %s520 = sld [smem:[#allocation6 + %s43]]
          %522 = vsyncadd %s513, 0
          %s523 = smul.addr %s520, 3
          %s524 = sadd.s32 %s44, %s523
          %s525 = smul.addr %s524, 8
          %s526 = scalar_lea.hbm %s6, %s525
          %s528 = sshll.u32 %s516, 4
          %s529 = int_to_ptr.vmem [resolvable:$true] %s528
          %s530 = sshll.u32 %s526, 4
          %s531 = int_to_ptr.hbm [resolvable:$true] %s530
          %533 = dma.vmem_to_hbm [thread:$0]  %s529, 128, %s531, %s513
        $region64: #{hetero_rgcn_forward_pallas.3} parent=35 // pred_fallthru
          _
      $region36: #{hetero_rgcn_forward_pallas.3} parent=5 // pred_fallthru
        _
      %p534 = scmp.le.s32.totalorder 2, %s34
      // Predicated region
      $region65: #{hetero_rgcn_forward_pallas.3} parent=5 // pred_check
        %p535 = pneg %p534
      $region66: #{hetero_rgcn_forward_pallas.3} parent=5 // pred_check_branch
        %537 = sbr.rel (%p535) target = $region68
      $region67: #{hetero_rgcn_forward_pallas.3} parent=5 // pred_region
        %s538 = ssub.s32 %s34, 2
        // Predicated region
        $region69: #{hetero_rgcn_forward_pallas.3} parent=67 // pred_check
          %p539 = pneg %p187
        $region70: #{hetero_rgcn_forward_pallas.3} parent=67 // pred_check_branch
          %541 = sbr.rel (%p539) target = $region72
        $region71: #{hetero_rgcn_forward_pallas.3} parent=67 // pred_region
          %s542 = sand.u32 %s172, 1
          %s543 = scalar_lea.sflag [#allocation9], %s542
          %s544 = sand.u32 %s172, 1
          %s545 = smul.addr %s544, 8
          %s546 = scalar_lea.vmem [#allocation12], %s545
          %548 = dma.done %s543, 128
        $region72: #{hetero_rgcn_forward_pallas.3} parent=67 // pred_fallthru
          _
      $region68: #{hetero_rgcn_forward_pallas.3} parent=5 // pred_fallthru
        _
    $region6: #{hetero_rgcn_forward_pallas.3} parent=1 // loop_footer
      %s38 = sadd.s32 1, %s34
    $region7: #{hetero_rgcn_forward_pallas.3} parent=1 // loop_footer_branch
      %33 = sbr.rel target = $region3
    $region8: #{hetero_rgcn_forward_pallas.3} parent=1 // loop_exit
      _
    %549 = vsyncpa [#allocation8], 1
    %s550 = scalar_lea.sflag [#allocation8], 1
    %551 = vsyncpa %s550, 1
    %552 = vsyncpa [#allocation11], 1
    %s553 = scalar_lea.sflag [#allocation11], 1
    %554 = vsyncpa %s553, 1
    %555 = vsyncpa [#allocation9], 1
    %s556 = scalar_lea.sflag [#allocation9], 1
    %557 = vsyncpa %s556, 1

</llo_original>
